<compile_context>
chip_gen: v7x
topology: tpu7x:2x2x1
jax: 0.10.0
libtpu: 0.0.40
codegen_flags: <defaults>
</compile_context>

<pallas_src>
import jax
import jax.numpy as jnp
from jax.experimental import pallas as pl
from jax.experimental.pallas import tpu as pltpu

EPS = 1e-5  # PyTorch BatchNorm1d default eps


def _round_up(x, m):
    return (x + m - 1) // m * m


def _cdiv(a, b):
    return -(-a // b)


def _bn_scale_shift(gamma, beta, mean, var, eps=EPS):
    """Fold eval-mode BatchNorm1d into y = x * scale + shift."""
    scale = gamma * jax.lax.rsqrt(var + eps)
    shift = beta - mean * scale
    return scale, shift


def tucker_kernel(e_ref, r_ref, w_ref, bn1_ref, o_ref, acc_ref, xs_ref):
    k_idx = pl.program_id(1)
    dim_p = e_ref.shape[1]
    rk = r_ref.shape[2]

    @pl.when(k_idx == 0)
    def _init():
        acc_ref[...] = jnp.zeros_like(acc_ref)

    x = e_ref[...]          # (bt, dim_p) f32; bn0 already folded on the host
    r_chunk = r_ref[0]      # (bt, rk)    f32

    # xs[b, kk*dim_p + i] = r[b, kk] * x[b, i]; scale in f32, store bf16.
    # Static, lane-aligned stores only (no 3-D reshape -> no relayout risk).
    for kk in range(rk):    # static unroll; rk is bounded by the wrapper
        xs_ref[:, kk * dim_p:(kk + 1) * dim_p] = (
            r_chunk[:, kk:kk + 1] * x).astype(xs_ref.dtype)

    # Single MXU contraction over (k, i): K = rk*dim_p fills the wide MXU and
    # the k-sum happens inside the MXU's f32 accumulator (no per-k VPU adds).
    acc_ref[...] += jnp.dot(xs_ref[...], w_ref[...],
                            preferred_element_type=jnp.float32)

    @pl.when(k_idx == pl.num_programs(1) - 1)
    def _finish():
        # bn1 (eval mode), pre-folded scale/shift; out_drop: identity.
        y = acc_ref[...] * bn1_ref[0:1, :] + bn1_ref[1:2, :]
        o_ref[...] = y.astype(o_ref.dtype)


def tucker_forward(e_embed, r_embed, W, bn0, bn1, *,
                   batch_tile=512, rk_unroll_max=32,
                   compute_dtype=jnp.bfloat16):
    """e_embed (B, dim), r_embed (B, r_dim), W (r_dim, dim, dim),
    bn0 / bn1 = (gamma, beta, running_mean, running_var) tuples of (dim,)."""
    B, dim = e_embed.shape
    r_dim = r_embed.shape[1]
    assert W.shape == (r_dim, dim, dim)

    f32 = jnp.float32
    out_dtype = e_embed.dtype
    s0, c0 = _bn_scale_shift(*[p.astype(f32) for p in bn0])
    s1, c1 = _bn_scale_shift(*[p.astype(f32) for p in bn1])

    # ---- lane-dense feature padding; batch tile multiple of 16, and capped at
    #      ceil(B/2) so grid[0] >= 2 (v7x megacore sharding of the batch axis).
    dim_p = _round_up(dim, 128)
    bt = _round_up(min(batch_tile, max(16, _cdiv(B, 2))), 16)
    Bp = _round_up(B, bt)

    # ---- generation-aware VMEM budget (~76 MiB on v5e/v6e, ~38 MiB on v7x).
    try:
        vmem_cap = int(pltpu.get_tpu_info().vmem_capacity_bytes)
    except Exception:
        vmem_cap = 64 << 20
    vmem_limit = max(16 << 20, int(vmem_cap * 0.6))

    w_item = jnp.dtype(compute_dtype).itemsize
    out_item = jnp.dtype(out_dtype).itemsize
    headroom = 6 << 20                       # compiler-internal scratch

    def _acts_bytes(rk):
        return (2 * bt * dim_p * 4           # e tile (double-buffered, f32)
                + 2 * bt * dim_p * out_item  # out tile
                + 2 * bt * rk * 4            # r chunk
                + bt * dim_p * 4             # acc scratch (f32)
                + bt * rk * dim_p * w_item   # xs scratch (bf16)
                + 4 * dim_p * 4)             # bn1 scale/shift

    # ---- W residency decision: keep the whole bf16 W resident in VMEM when it
    #      (double-buffered) plus activations fits the budget; otherwise stream
    #      (rk_tile, dim, dim) chunks along the inner "arbitrary" axis.
    w_full_bytes = r_dim * dim_p * dim_p * w_item
    resident = (r_dim <= rk_unroll_max and
                2 * w_full_bytes + _acts_bytes(r_dim) + headroom <= vmem_limit)
    if resident:
        n_k, rk_tile = 1, r_dim
    else:
        budget = vmem_limit - headroom
        rk_fit = 1
        for cand in range(min(rk_unroll_max, r_dim), 0, -1):
            if 2 * cand * dim_p * dim_p * w_item + _acts_bytes(cand) <= budget:
                rk_fit = cand
                break
        n_k = _cdiv(r_dim, rk_fit)
        rk_tile = _cdiv(r_dim, n_k)
        n_k = _cdiv(r_dim, rk_tile)
    r_dim_p = n_k * rk_tile

    # ---- plain-JAX glue: fold bn0 into e, pad, lay out operands.
    x0 = e_embed.astype(f32) * s0 + c0                       # bn0 (eval), drop=id
    e_p = jnp.zeros((Bp, dim_p), f32).at[:B, :dim].set(x0)
    r_p = jnp.zeros((Bp, r_dim_p), f32).at[:B, :r_dim].set(r_embed.astype(f32))
    r3 = r_p.reshape(Bp, n_k, rk_tile).transpose(1, 0, 2)    # (n_k, Bp, rk)
    W_p = (jnp.zeros((r_dim_p, dim_p, dim_p), f32)
           .at[:r_dim, :dim, :dim].set(W.astype(f32))).astype(compute_dtype)
    W2 = W_p.reshape(r_dim_p * dim_p, dim_p)                 # 2-D MXU RHS

    def _pad_vec(v):
        return jnp.zeros((dim_p,), f32).at[:dim].set(v)

    bn1_p = jnp.stack([_pad_vec(s1), _pad_vec(c1)])          # (2, dim_p)

    grid = (Bp // bt, n_k)                                   # (parallel, arbitrary)
    w_index = (lambda i, k: (0, 0)) if resident else (lambda i, k: (k, 0))

    out_p = pl.pallas_call(
        tucker_kernel,
        out_shape=jax.ShapeDtypeStruct((Bp, dim_p), out_dtype),
        grid_spec=pltpu.PrefetchScalarGridSpec(
            num_scalar_prefetch=0,
            grid=grid,
            in_specs=[
                pl.BlockSpec((bt, dim_p), lambda i, k: (i, 0)),          # e tile (bn0 folded)
                pl.BlockSpec((1, bt, rk_tile), lambda i, k: (k, i, 0)),  # r chunk
                pl.BlockSpec((rk_tile * dim_p, dim_p), w_index),         # W (resident or chunk)
                pl.BlockSpec((2, dim_p), lambda i, k: (0, 0)),           # bn1 scale/shift
            ],
            out_specs=pl.BlockSpec((bt, dim_p), lambda i, k: (i, 0)),
            scratch_shapes=[
                pltpu.VMEM((bt, dim_p), jnp.float32),                    # accumulator
                pltpu.VMEM((bt, rk_tile * dim_p), compute_dtype),        # xs = r (x) x
            ],
        ),
        compiler_params=pltpu.CompilerParams(
            dimension_semantics=("parallel", "arbitrary"),
            vmem_limit_bytes=vmem_limit,
        ),
        cost_estimate=pl.CostEstimate(
            flops=2 * Bp * r_dim_p * dim_p * dim_p,
            transcendentals=0,
            bytes_accessed=int(
                W2.size * w_item * (1 if resident else grid[0])
                + e_p.nbytes + r3.nbytes + Bp * dim_p * out_item),
        ),
    )(e_p, r3, W2, bn1_p)

    return out_p[:B, :dim]


def reference_forward(e_embed, r_embed, W, bn0, bn1, *, compute_dtype=jnp.float32):
    """Pure-JAX reference of the PyTorch forward (eval mode). With
    compute_dtype=bf16 it mirrors the kernel's rounding exactly
    (scale r*x in f32 -> cast -> bf16 matmul with f32 accumulation)."""
    s0, c0 = _bn_scale_shift(*bn0)
    s1, c1 = _bn_scale_shift(*bn1)
    x = e_embed.astype(jnp.float32) * s0 + c0
    xs = (r_embed.astype(jnp.float32)[:, :, None] * x[:, None, :]).astype(compute_dtype)
    y = jnp.einsum('bki,kij->bj', xs, W.astype(compute_dtype),
                   preferred_element_type=jnp.float32)
    return y * s1 + c1


if __name__ == "__main__":
    # Small shapes chosen to exercise batch padding/tiling (50 -> 2 tiles of 32),
    # lane padding (96 -> 128) and the resident-W fast path (r_dim = 12).
    B, DIM, R_DIM = 50, 96, 12

    key = jax.random.PRNGKey(0)
    ks = jax.random.split(key, 11)

    # W: xavier_uniform over (r_dim, dim, dim)
    a = (6.0 / (DIM * DIM + R_DIM * DIM)) ** 0.5
    W = jax.random.uniform(ks[0], (R_DIM, DIM, DIM), jnp.float32, minval=-a, maxval=a)

    bn0 = (jax.random.uniform(ks[1], (DIM,), jnp.float32, 0.8, 1.2),
           jax.random.uniform(ks[2], (DIM,), jnp.float32, -0.1, 0.1),
           0.1 * jax.random.normal(ks[3], (DIM,), jnp.float32),
           jax.random.uniform(ks[4], (DIM,), jnp.float32, 0.5, 1.5))
    bn1 = (jax.random.uniform(ks[5], (DIM,), jnp.float32, 0.8, 1.2),
           jax.random.uniform(ks[6], (DIM,), jnp.float32, -0.1, 0.1),
           0.1 * jax.random.normal(ks[7], (DIM,), jnp.float32),
           jax.random.uniform(ks[8], (DIM,), jnp.float32, 0.5, 1.5))

    e_embed = jax.random.normal(ks[9], (B, DIM), jnp.float32)
    r_embed = jax.random.normal(ks[10], (B, R_DIM), jnp.float32)

    out = tucker_forward(e_embed, r_embed, W, bn0, bn1)
    out = jax.block_until_ready(out)
    assert out.shape == (B, DIM)

    # Tight check vs a reference with identical bf16 rounding, loose check vs
    # the exact f32 eval-mode module semantics.
    ref_bf16 = reference_forward(e_embed, r_embed, W, bn0, bn1, compute_dtype=jnp.bfloat16)
    ref_f32 = reference_forward(e_embed, r_embed, W, bn0, bn1, compute_dtype=jnp.float32)
    assert jnp.allclose(out, ref_bf16, rtol=1e-3, atol=1e-3), "mismatch vs bf16 reference"
    assert jnp.allclose(out, ref_f32, rtol=3e-2, atol=3e-2), "mismatch vs f32 reference"

    print("KERNEL_OK")
</pallas_src>

<mosaic_0001>
module attributes {stable_mosaic.version = 11 : i64} {
  func.func @tucker_kernel(%arg0: i32, %arg1: i32, %arg2: memref<32x128xf32, #tpu.memory_space<vmem>>, %arg3: memref<1x32x12xf32, #tpu.memory_space<vmem>>, %arg4: memref<1536x128xbf16, #tpu.memory_space<vmem>>, %arg5: memref<2x128xf32, #tpu.memory_space<vmem>>, %arg6: memref<32x128xf32, #tpu.memory_space<vmem>>, %arg7: memref<32x128xf32, #tpu.memory_space<vmem>>, %arg8: memref<32x1536xbf16, #tpu.memory_space<vmem>>) attributes {dimension_semantics = [#tpu.dimension_semantics<parallel>, #tpu.dimension_semantics<arbitrary>], iteration_bounds = array<i64: 2, 1>, scalar_prefetch = 0 : i64, scratch_operands = 2 : i64, tpu.core_type = #tpu.core_type<tc>, window_params = [{transform_indices = @transform_0, window_bounds = array<i64: 32, 128>}, {transform_indices = @transform_1, window_bounds = array<i64: 1, 32, 12>}, {pipeline_mode = #tpu.pipeline_mode<synchronous>, transform_indices = @transform_2, window_bounds = array<i64: 1536, 128>}, {pipeline_mode = #tpu.pipeline_mode<synchronous>, transform_indices = @transform_3, window_bounds = array<i64: 2, 128>}, {transform_indices = @transform_4, window_bounds = array<i64: 32, 128>}]} {
    %c0_i32 = arith.constant 0 : i32
    %0 = arith.cmpi eq, %arg1, %c0_i32 : i32
    %1 = arith.extui %0 : i1 to i32
    %c0_i32_0 = arith.constant 0 : i32
    %2 = arith.cmpi ne, %1, %c0_i32_0 : i32
    scf.if %2 {
      %cst_28 = arith.constant 0.000000e+00 : f32
      %75 = vector.broadcast %cst_28 : f32 to vector<32x128xf32>
      %c0_29 = arith.constant 0 : index
      %c0_30 = arith.constant 0 : index
      %76 = vector.load %arg7[%c0_29, %c0_30] : memref<32x128xf32, #tpu.memory_space<vmem>>, vector<32x128xf32>
      tpu.vector_store %arg7[%c0_29, %c0_30], %75 {strides = array<i32>} : memref<32x128xf32, #tpu.memory_space<vmem>>, vector<32x128xf32>,
    } else {
    }
    %c0 = arith.constant 0 : index
    %c0_1 = arith.constant 0 : index
    %3 = vector.load %arg2[%c0, %c0_1] : memref<32x128xf32, #tpu.memory_space<vmem>>, vector<32x128xf32>
    %c0_2 = arith.constant 0 : index
    %c0_3 = arith.constant 0 : index
    %c0_4 = arith.constant 0 : index
    %4 = vector.load %arg3[%c0_2, %c0_3, %c0_4] : memref<1x32x12xf32, #tpu.memory_space<vmem>>, vector<1x32x12xf32>
    %5 = vector.shape_cast %4 : vector<1x32x12xf32> to vector<32x12xf32>
    %6 = vector.extract_strided_slice %5 {offsets = [0, 0], sizes = [32, 1], strides = [1, 1]} : vector<32x12xf32> to vector<32x1xf32>
    %7 = vector.broadcast %6 : vector<32x1xf32> to vector<32x128xf32>
    %8 = arith.mulf %7, %3 : vector<32x128xf32>
    %9 = arith.truncf %8 : vector<32x128xf32> to vector<32x128xbf16>
    %c0_5 = arith.constant 0 : index
    %c0_6 = arith.constant 0 : index
    %10 = vector.load %arg8[%c0_5, %c0_6] : memref<32x1536xbf16, #tpu.memory_space<vmem>>, vector<32x128xbf16>
    tpu.vector_store %arg8[%c0_5, %c0_6], %9 {strides = array<i32>} : memref<32x1536xbf16, #tpu.memory_space<vmem>>, vector<32x128xbf16>,
    %11 = vector.extract_strided_slice %5 {offsets = [0, 1], sizes = [32, 1], strides = [1, 1]} : vector<32x12xf32> to vector<32x1xf32>
    %12 = vector.broadcast %11 : vector<32x1xf32> to vector<32x128xf32>
    %13 = arith.mulf %12, %3 : vector<32x128xf32>
    %14 = arith.truncf %13 : vector<32x128xf32> to vector<32x128xbf16>
    %c0_7 = arith.constant 0 : index
    %c128 = arith.constant 128 : index
    %15 = vector.load %arg8[%c0_7, %c128] : memref<32x1536xbf16, #tpu.memory_space<vmem>>, vector<32x128xbf16>
    tpu.vector_store %arg8[%c0_7, %c128], %14 {strides = array<i32>} : memref<32x1536xbf16, #tpu.memory_space<vmem>>, vector<32x128xbf16>,
    %16 = vector.extract_strided_slice %5 {offsets = [0, 2], sizes = [32, 1], strides = [1, 1]} : vector<32x12xf32> to vector<32x1xf32>
    %17 = vector.broadcast %16 : vector<32x1xf32> to vector<32x128xf32>
    %18 = arith.mulf %17, %3 : vector<32x128xf32>
    %19 = arith.truncf %18 : vector<32x128xf32> to vector<32x128xbf16>
    %c0_8 = arith.constant 0 : index
    %c256 = arith.constant 256 : index
    %20 = vector.load %arg8[%c0_8, %c256] : memref<32x1536xbf16, #tpu.memory_space<vmem>>, vector<32x128xbf16>
    tpu.vector_store %arg8[%c0_8, %c256], %19 {strides = array<i32>} : memref<32x1536xbf16, #tpu.memory_space<vmem>>, vector<32x128xbf16>,
    %21 = vector.extract_strided_slice %5 {offsets = [0, 3], sizes = [32, 1], strides = [1, 1]} : vector<32x12xf32> to vector<32x1xf32>
    %22 = vector.broadcast %21 : vector<32x1xf32> to vector<32x128xf32>
    %23 = arith.mulf %22, %3 : vector<32x128xf32>
    %24 = arith.truncf %23 : vector<32x128xf32> to vector<32x128xbf16>
    %c0_9 = arith.constant 0 : index
    %c384 = arith.constant 384 : index
    %25 = vector.load %arg8[%c0_9, %c384] : memref<32x1536xbf16, #tpu.memory_space<vmem>>, vector<32x128xbf16>
    tpu.vector_store %arg8[%c0_9, %c384], %24 {strides = array<i32>} : memref<32x1536xbf16, #tpu.memory_space<vmem>>, vector<32x128xbf16>,
    %26 = vector.extract_strided_slice %5 {offsets = [0, 4], sizes = [32, 1], strides = [1, 1]} : vector<32x12xf32> to vector<32x1xf32>
    %27 = vector.broadcast %26 : vector<32x1xf32> to vector<32x128xf32>
    %28 = arith.mulf %27, %3 : vector<32x128xf32>
    %29 = arith.truncf %28 : vector<32x128xf32> to vector<32x128xbf16>
    %c0_10 = arith.constant 0 : index
    %c512 = arith.constant 512 : index
    %30 = vector.load %arg8[%c0_10, %c512] : memref<32x1536xbf16, #tpu.memory_space<vmem>>, vector<32x128xbf16>
    tpu.vector_store %arg8[%c0_10, %c512], %29 {strides = array<i32>} : memref<32x1536xbf16, #tpu.memory_space<vmem>>, vector<32x128xbf16>,
    %31 = vector.extract_strided_slice %5 {offsets = [0, 5], sizes = [32, 1], strides = [1, 1]} : vector<32x12xf32> to vector<32x1xf32>
    %32 = vector.broadcast %31 : vector<32x1xf32> to vector<32x128xf32>
    %33 = arith.mulf %32, %3 : vector<32x128xf32>
    %34 = arith.truncf %33 : vector<32x128xf32> to vector<32x128xbf16>
    %c0_11 = arith.constant 0 : index
    %c640 = arith.constant 640 : index
    %35 = vector.load %arg8[%c0_11, %c640] : memref<32x1536xbf16, #tpu.memory_space<vmem>>, vector<32x128xbf16>
    tpu.vector_store %arg8[%c0_11, %c640], %34 {strides = array<i32>} : memref<32x1536xbf16, #tpu.memory_space<vmem>>, vector<32x128xbf16>,
    %36 = vector.extract_strided_slice %5 {offsets = [0, 6], sizes = [32, 1], strides = [1, 1]} : vector<32x12xf32> to vector<32x1xf32>
    %37 = vector.broadcast %36 : vector<32x1xf32> to vector<32x128xf32>
    %38 = arith.mulf %37, %3 : vector<32x128xf32>
    %39 = arith.truncf %38 : vector<32x128xf32> to vector<32x128xbf16>
    %c0_12 = arith.constant 0 : index
    %c768 = arith.constant 768 : index
    %40 = vector.load %arg8[%c0_12, %c768] : memref<32x1536xbf16, #tpu.memory_space<vmem>>, vector<32x128xbf16>
    tpu.vector_store %arg8[%c0_12, %c768], %39 {strides = array<i32>} : memref<32x1536xbf16, #tpu.memory_space<vmem>>, vector<32x128xbf16>,
    %41 = vector.extract_strided_slice %5 {offsets = [0, 7], sizes = [32, 1], strides = [1, 1]} : vector<32x12xf32> to vector<32x1xf32>
    %42 = vector.broadcast %41 : vector<32x1xf32> to vector<32x128xf32>
    %43 = arith.mulf %42, %3 : vector<32x128xf32>
    %44 = arith.truncf %43 : vector<32x128xf32> to vector<32x128xbf16>
    %c0_13 = arith.constant 0 : index
    %c896 = arith.constant 896 : index
    %45 = vector.load %arg8[%c0_13, %c896] : memref<32x1536xbf16, #tpu.memory_space<vmem>>, vector<32x128xbf16>
    tpu.vector_store %arg8[%c0_13, %c896], %44 {strides = array<i32>} : memref<32x1536xbf16, #tpu.memory_space<vmem>>, vector<32x128xbf16>,
    %46 = vector.extract_strided_slice %5 {offsets = [0, 8], sizes = [32, 1], strides = [1, 1]} : vector<32x12xf32> to vector<32x1xf32>
    %47 = vector.broadcast %46 : vector<32x1xf32> to vector<32x128xf32>
    %48 = arith.mulf %47, %3 : vector<32x128xf32>
    %49 = arith.truncf %48 : vector<32x128xf32> to vector<32x128xbf16>
    %c0_14 = arith.constant 0 : index
    %c1024 = arith.constant 1024 : index
    %50 = vector.load %arg8[%c0_14, %c1024] : memref<32x1536xbf16, #tpu.memory_space<vmem>>, vector<32x128xbf16>
    tpu.vector_store %arg8[%c0_14, %c1024], %49 {strides = array<i32>} : memref<32x1536xbf16, #tpu.memory_space<vmem>>, vector<32x128xbf16>,
    %51 = vector.extract_strided_slice %5 {offsets = [0, 9], sizes = [32, 1], strides = [1, 1]} : vector<32x12xf32> to vector<32x1xf32>
    %52 = vector.broadcast %51 : vector<32x1xf32> to vector<32x128xf32>
    %53 = arith.mulf %52, %3 : vector<32x128xf32>
    %54 = arith.truncf %53 : vector<32x128xf32> to vector<32x128xbf16>
    %c0_15 = arith.constant 0 : index
    %c1152 = arith.constant 1152 : index
    %55 = vector.load %arg8[%c0_15, %c1152] : memref<32x1536xbf16, #tpu.memory_space<vmem>>, vector<32x128xbf16>
    tpu.vector_store %arg8[%c0_15, %c1152], %54 {strides = array<i32>} : memref<32x1536xbf16, #tpu.memory_space<vmem>>, vector<32x128xbf16>,
    %56 = vector.extract_strided_slice %5 {offsets = [0, 10], sizes = [32, 1], strides = [1, 1]} : vector<32x12xf32> to vector<32x1xf32>
    %57 = vector.broadcast %56 : vector<32x1xf32> to vector<32x128xf32>
    %58 = arith.mulf %57, %3 : vector<32x128xf32>
    %59 = arith.truncf %58 : vector<32x128xf32> to vector<32x128xbf16>
    %c0_16 = arith.constant 0 : index
    %c1280 = arith.constant 1280 : index
    %60 = vector.load %arg8[%c0_16, %c1280] : memref<32x1536xbf16, #tpu.memory_space<vmem>>, vector<32x128xbf16>
    tpu.vector_store %arg8[%c0_16, %c1280], %59 {strides = array<i32>} : memref<32x1536xbf16, #tpu.memory_space<vmem>>, vector<32x128xbf16>,
    %61 = vector.extract_strided_slice %5 {offsets = [0, 11], sizes = [32, 1], strides = [1, 1]} : vector<32x12xf32> to vector<32x1xf32>
    %62 = vector.broadcast %61 : vector<32x1xf32> to vector<32x128xf32>
    %63 = arith.mulf %62, %3 : vector<32x128xf32>
    %64 = arith.truncf %63 : vector<32x128xf32> to vector<32x128xbf16>
    %c0_17 = arith.constant 0 : index
    %c1408 = arith.constant 1408 : index
    %65 = vector.load %arg8[%c0_17, %c1408] : memref<32x1536xbf16, #tpu.memory_space<vmem>>, vector<32x128xbf16>
    tpu.vector_store %arg8[%c0_17, %c1408], %64 {strides = array<i32>} : memref<32x1536xbf16, #tpu.memory_space<vmem>>, vector<32x128xbf16>,
    %c0_18 = arith.constant 0 : index
    %c0_19 = arith.constant 0 : index
    %66 = vector.load %arg7[%c0_18, %c0_19] : memref<32x128xf32, #tpu.memory_space<vmem>>, vector<32x128xf32>
    %c0_20 = arith.constant 0 : index
    %c0_21 = arith.constant 0 : index
    %67 = vector.load %arg8[%c0_20, %c0_21] : memref<32x1536xbf16, #tpu.memory_space<vmem>>, vector<32x1536xbf16>
    %c0_22 = arith.constant 0 : index
    %c0_23 = arith.constant 0 : index
    %68 = vector.load %arg4[%c0_22, %c0_23] : memref<1536x128xbf16, #tpu.memory_space<vmem>>, vector<1536x128xbf16>
    %cst = arith.constant dense<0.000000e+00> : vector<32x128xf32>
    %69 = tpu.matmul %67, %68, %cst {dimension_numbers = #tpu.dot_dimension_numbers<[1], [0], [0], [1], [0, 0, 1, 1], [], []>} : vector<32x1536xbf16>, vector<1536x128xbf16>, vector<32x128xf32> -> vector<32x128xf32>
    %70 = arith.addf %66, %69 : vector<32x128xf32>
    %c0_24 = arith.constant 0 : index
    %c0_25 = arith.constant 0 : index
    %71 = vector.load %arg7[%c0_24, %c0_25] : memref<32x128xf32, #tpu.memory_space<vmem>>, vector<32x128xf32>
    tpu.vector_store %arg7[%c0_24, %c0_25], %70 {strides = array<i32>} : memref<32x128xf32, #tpu.memory_space<vmem>>, vector<32x128xf32>,
    %c0_i32_26 = arith.constant 0 : i32
    %72 = arith.cmpi eq, %arg1, %c0_i32_26 : i32
    %73 = arith.extui %72 : i1 to i32
    %c0_i32_27 = arith.constant 0 : i32
    %74 = arith.cmpi ne, %73, %c0_i32_27 : i32
    scf.if %74 {
      %c0_28 = arith.constant 0 : index
      %c0_29 = arith.constant 0 : index
      %75 = vector.load %arg7[%c0_28, %c0_29] : memref<32x128xf32, #tpu.memory_space<vmem>>, vector<32x128xf32>
      %c0_30 = arith.constant 0 : index
      %c0_31 = arith.constant 0 : index
      %76 = vector.load %arg5[%c0_30, %c0_31] : memref<2x128xf32, #tpu.memory_space<vmem>>, vector<1x128xf32>
      %77 = vector.broadcast %76 : vector<1x128xf32> to vector<32x128xf32>
      %78 = arith.mulf %75, %77 : vector<32x128xf32>
      %c1 = arith.constant 1 : index
      %c0_32 = arith.constant 0 : index
      %79 = vector.load %arg5[%c1, %c0_32] : memref<2x128xf32, #tpu.memory_space<vmem>>, vector<1x128xf32>
      %80 = vector.broadcast %79 : vector<1x128xf32> to vector<32x128xf32>
      %81 = arith.addf %78, %80 : vector<32x128xf32>
      %c0_33 = arith.constant 0 : index
      %c0_34 = arith.constant 0 : index
      %82 = vector.load %arg6[%c0_33, %c0_34] : memref<32x128xf32, #tpu.memory_space<vmem>>, vector<32x128xf32>
      tpu.vector_store %arg6[%c0_33, %c0_34], %81 {strides = array<i32>} : memref<32x128xf32, #tpu.memory_space<vmem>>, vector<32x128xf32>,
    } else {
    }
    return
  }
  func.func @transform_0(%arg0: i32, %arg1: i32) -> (i32, i32) {
    %c0_i32 = arith.constant 0 : i32
    %c0_i32_0 = arith.constant 0 : i32
    return %arg0, %c0_i32 : i32, i32
  }
  func.func @transform_1(%arg0: i32, %arg1: i32) -> (i32, i32, i32) {
    %c0_i32 = arith.constant 0 : i32
    %c0_i32_0 = arith.constant 0 : i32
    return %arg1, %arg0, %c0_i32 : i32, i32, i32
  }
  func.func @transform_2(%arg0: i32, %arg1: i32) -> (i32, i32) {
    %c0_i32 = arith.constant 0 : i32
    %c0_i32_0 = arith.constant 0 : i32
    %c0_i32_1 = arith.constant 0 : i32
    return %c0_i32, %c0_i32_0 : i32, i32
  }
  func.func @transform_3(%arg0: i32, %arg1: i32) -> (i32, i32) {
    %c0_i32 = arith.constant 0 : i32
    %c0_i32_0 = arith.constant 0 : i32
    %c0_i32_1 = arith.constant 0 : i32
    return %c0_i32, %c0_i32_0 : i32, i32
  }
  func.func @transform_4(%arg0: i32, %arg1: i32) -> (i32, i32) {
    %c0_i32 = arith.constant 0 : i32
    %c0_i32_0 = arith.constant 0 : i32
    return %arg0, %c0_i32 : i32, i32
  }
}

</mosaic_0001>

<llo_original>
// kernel: tpu_custom_call.1
$region0: #{tpu_custom_call.1}
  #allocation0 [shape = 'u32[]', space=smem, size = 0x4, offset = 0x4, fixed_abs, tag = 'smem constant byte address 0x4 - core index']
  #allocation1 [shape = 'u32[144,128]{1,0:T(1,128)}', space=vmem, size = 0x12000, scoped, tag = 'internal scratch']
  #allocation2 [shape = 'f32[32,128]{1,0:T(8,128)}', space=vmem, size = 0x4000, scoped, tag = 'scratch operand']
  #allocation3 [shape = 'bf16[32,1536]{1,0:T(16,128)(2,1)}', space=vmem, size = 0x18000, scoped, tag = 'scratch operand']
  %s0 = inlined_call_operand.vmem [shape: f32[64,128], index: 0, kind: input, shape index: {}]
  %s1 = inlined_call_operand.vmem [shape: f32[1,64,12], index: 1, kind: input, shape index: {}]
  %s2 = inlined_call_operand.hbm [shape: bf16[1536,128], index: 2, kind: input, shape index: {}]
  %s3 = inlined_call_operand.vmem [shape: f32[2,128], index: 3, kind: input, shape index: {}]
  %s4 = inlined_call_operand.hbm [shape: f32[64,128], index: 4, kind: output, shape index: {}]
  %s5 = sld [smem:[#allocation0]]
  $region61: #{tpu_custom_call.1} parent=0
    _
  %s7 = ssub.s32 1, %s5
  %s8 = scalar_select 0, %s7, %s5
  $region1: #{tpu_custom_call.1} parent=0
    #allocation4 [shape = 'u8[393216]{0}', space=vmem, size = 0x60000, scoped, tag = 'input window, operand 2, single buffered']
    #allocation5 [shape = 's32[2]{0}', space=sflag, size = 0x8, scoped, tag = 'scoped memory for tpu_custom_call.1']
    #allocation6 [shape = 's32[2]{0}', space=sflag, size = 0x8, scoped, tag = 'scoped memory for tpu_custom_call.1']
    #allocation7 [shape = 'u8[32768]{0}', space=vmem, size = 0x8000, scoped, tag = 'output window, operand 0']
    %9 = vsyncpa [#allocation5], 0
    %10 = vsyncpa [#allocation6], 0
    %s11 = scalar_lea.sflag [#allocation6], 1
    %12 = vsyncpa %s11, 0
    loop: start=0, step=1, limit=4
    $region2: #{tpu_custom_call.1} parent=1 // loop_pre_header
      _
    $region3: #{tpu_custom_call.1} parent=1 // loop_header
      %s14 = sphi 0, %s18
      %p15 = scmp.ge.s32.totalorder %s14, 4
      %s21 = sphi 0, %s33
      %s22 = sphi 0, %s29
      %s23 = sphi 0, %s21
      %s24 = sphi 0, %s22
      %s25 = sphi 0, %s23
      %s26 = sphi 0, %s24
      %s36 = sphi 0, %s38
      %s39 = sphi 0, %s36
      %s40 = sphi 0, %s39
      %s56 = sphi 0, %s40
      %s64 = sphi 0, %s66
      %s67 = sphi 0, %s64
      %s68 = sphi 0, %s67
      %s84 = sphi 0, %s68
      %s88 = sphi 0, %s88
      %s90 = sphi 0, %s88
      %s91 = sphi 0, %s90
      %s105 = sphi 0, %s91
      %s109 = sphi 0, %s109
      %s111 = sphi 0, %s109
      %s112 = sphi 0, %s111
      %s126 = sphi 0, %s112
      %s132 = sphi 0, %s134
      %s135 = sphi 0, %s132
      %s136 = sphi 0, %s135
      %s152 = sphi 0, %s136
    $region4: #{tpu_custom_call.1} parent=1 // loop_header_branch
      %17 = sbr.rel (%p15) target = $region8
    $region5: #{tpu_custom_call.1} parent=1 // loop_body
      %s19 = ssub.s32 %s14, 1
      %s20 = ssub.s32 %s14, 2
      %s27 = sadd.s32 1, %s22
      %p28 = scmp.ge.s32.totalorder %s27, 1
      %s29 = scalar_select %p28, 0, %s27
      %s30 = sadd.s32 1, %s21
      %s31 = scalar_select %p28, %s30, %s21
      %p32 = scmp.ge.s32.totalorder %s31, 2
      %s33 = scalar_select %p32, 0, %s31
      %s34 = ssub.s32 %s21, %s33
      %p35 = scmp.eq.s32.totalorder %s34, 0
      %s37 = sadd.s32 %s36, 1
      %s38 = scalar_select %p35, %s36, %s37
      %p41 = pneg %p35
      %p42 = scmp.eq.s32.totalorder %s14, 1
      %p43 = por %p41, %p42
      %p44 = scmp.ne.s32.totalorder %s36, %s39
      %p45 = scmp.eq.s32.totalorder %s14, 0
      %p46 = por %p44, %p45
      %p47 = scmp.ne.s32.totalorder %s36, %s39
      %p48 = scmp.eq.s32.totalorder %s19, 1
      %p49 = por %p47, %p48
      %p50 = scmp.ne.s32.totalorder %s39, %s40
      %p51 = scmp.eq.s32.totalorder %s19, 0
      %p52 = por %p50, %p51
      %p53 = scmp.ne.s32.totalorder %s39, %s40
      %p54 = scmp.eq.s32.totalorder %s20, 1
      %p55 = por %p53, %p54
      %p57 = scmp.ne.s32.totalorder %s40, %s56
      %p58 = scmp.eq.s32.totalorder %s20, 0
      %p59 = por %p57, %p58
      %s60 = ssub.s32 %s22, %s29
      %s61 = ssub.s32 %s21, %s33
      %s62 = sor.u32 %s60, %s61
      %p63 = scmp.eq.s32.totalorder %s62, 0
      %s65 = sadd.s32 %s64, 1
      %s66 = scalar_select %p63, %s64, %s65
      %p69 = pneg %p63
      %p70 = scmp.eq.s32.totalorder %s14, 1
      %p71 = por %p69, %p70
      %p72 = scmp.ne.s32.totalorder %s64, %s67
      %p73 = scmp.eq.s32.totalorder %s14, 0
      %p74 = por %p72, %p73
      %p75 = scmp.ne.s32.totalorder %s64, %s67
      %p76 = scmp.eq.s32.totalorder %s19, 1
      %p77 = por %p75, %p76
      %p78 = scmp.ne.s32.totalorder %s67, %s68
      %p79 = scmp.eq.s32.totalorder %s19, 0
      %p80 = por %p78, %p79
      %p81 = scmp.ne.s32.totalorder %s67, %s68
      %p82 = scmp.eq.s32.totalorder %s20, 1
      %p83 = por %p81, %p82
      %p85 = scmp.ne.s32.totalorder %s68, %s84
      %p86 = scmp.eq.s32.totalorder %s20, 0
      %p87 = por %p85, %p86
      %s89 = sadd.s32 %s88, 1
      %p92 = scmp.eq.s32.totalorder %s14, 1
      %p93 = scmp.ne.s32.totalorder %s88, %s90
      %p94 = scmp.eq.s32.totalorder %s14, 0
      %p95 = por %p93, %p94
      %p96 = scmp.ne.s32.totalorder %s88, %s90
      %p97 = scmp.eq.s32.totalorder %s19, 1
      %p98 = por %p96, %p97
      %p99 = scmp.ne.s32.totalorder %s90, %s91
      %p100 = scmp.eq.s32.totalorder %s19, 0
      %p101 = por %p99, %p100
      %p102 = scmp.ne.s32.totalorder %s90, %s91
      %p103 = scmp.eq.s32.totalorder %s20, 1
      %p104 = por %p102, %p103
      %p106 = scmp.ne.s32.totalorder %s91, %s105
      %p107 = scmp.eq.s32.totalorder %s20, 0
      %p108 = por %p106, %p107
      %s110 = sadd.s32 %s109, 1
      %p113 = scmp.eq.s32.totalorder %s14, 1
      %p114 = scmp.ne.s32.totalorder %s109, %s111
      %p115 = scmp.eq.s32.totalorder %s14, 0
      %p116 = por %p114, %p115
      %p117 = scmp.ne.s32.totalorder %s109, %s111
      %p118 = scmp.eq.s32.totalorder %s19, 1
      %p119 = por %p117, %p118
      %p120 = scmp.ne.s32.totalorder %s111, %s112
      %p121 = scmp.eq.s32.totalorder %s19, 0
      %p122 = por %p120, %p121
      %p123 = scmp.ne.s32.totalorder %s111, %s112
      %p124 = scmp.eq.s32.totalorder %s20, 1
      %p125 = por %p123, %p124
      %p127 = scmp.ne.s32.totalorder %s112, %s126
      %p128 = scmp.eq.s32.totalorder %s20, 0
      %p129 = por %p127, %p128
      %s130 = ssub.s32 %s21, %s33
      %p131 = scmp.eq.s32.totalorder %s130, 0
      %s133 = sadd.s32 %s132, 1
      %s134 = scalar_select %p131, %s132, %s133
      %p137 = pneg %p131
      %p138 = scmp.eq.s32.totalorder %s14, 1
      %p139 = por %p137, %p138
      %p140 = scmp.ne.s32.totalorder %s132, %s135
      %p141 = scmp.eq.s32.totalorder %s14, 0
      %p142 = por %p140, %p141
      %p143 = scmp.ne.s32.totalorder %s132, %s135
      %p144 = scmp.eq.s32.totalorder %s19, 1
      %p145 = por %p143, %p144
      %p146 = scmp.ne.s32.totalorder %s135, %s136
      %p147 = scmp.eq.s32.totalorder %s19, 0
      %p148 = por %p146, %p147
      %p149 = scmp.ne.s32.totalorder %s135, %s136
      %p150 = scmp.eq.s32.totalorder %s20, 1
      %p151 = por %p149, %p150
      %p153 = scmp.ne.s32.totalorder %s136, %s152
      %p154 = scmp.eq.s32.totalorder %s20, 0
      %p155 = por %p153, %p154
      %p156 = scmp.le.s32.totalorder 1, %s14
      %p157 = scmp.lt.s32.totalorder %s14, 3
      %p158 = pnand %p156, %p157
      %p159 = pneg %p158
      // Predicated region
      $region9: #{tpu_custom_call.1} parent=5 // pred_check
        _
      $region10: #{tpu_custom_call.1} parent=5 // pred_check_branch
        %161 = sbr.rel (%p158) target = $region12
      $region11: #{tpu_custom_call.1} parent=5 // pred_region
        %s162 = ssub.s32 %s14, 1
        // Predicated region
        $region13: #{tpu_custom_call.1} parent=11 // pred_check
          %p163 = pneg %p101
        $region14: #{tpu_custom_call.1} parent=11 // pred_check_branch
          %165 = sbr.rel (%p163) target = $region16
        $region15: #{tpu_custom_call.1} parent=11 // pred_region
          %s167 = ssub.s32 12288, 12288
          %168 = vsyncadd [#allocation5], %s167
          %s169 = sshll.u32 [#allocation4], 4
          %s170 = int_to_ptr.vmem [resolvable:$true] %s169
          %175 = dma.hbm_to_vmem [thread:$0]  %s2, 12288, %s170, [#allocation5], 64, 64, 4
        $region16: #{tpu_custom_call.1} parent=11 // pred_fallthru
          _
        // Predicated region
        $region17: #{tpu_custom_call.1} parent=11 // pred_check
          %p176 = pneg %p122
        $region18: #{tpu_custom_call.1} parent=11 // pred_check_branch
          %178 = sbr.rel (%p176) target = $region20
        $region19: #{tpu_custom_call.1} parent=11 // pred_region
          _
        $region20: #{tpu_custom_call.1} parent=11 // pred_fallthru
          _
      $region12: #{tpu_custom_call.1} parent=5 // pred_fallthru
        _
      %p179 = scmp.lt.s32.totalorder %s14, 2
      // Predicated region
      $region21: #{tpu_custom_call.1} parent=5 // pred_check
        %p180 = pneg %p179
      $region22: #{tpu_custom_call.1} parent=5 // pred_check_branch
        %182 = sbr.rel (%p180) target = $region24
      $region23: #{tpu_custom_call.1} parent=5 // pred_region
        // Predicated region
        $region25: #{tpu_custom_call.1} parent=23 // pred_check
          %p183 = pneg %p46
        $region26: #{tpu_custom_call.1} parent=23 // pred_check_branch
          %185 = sbr.rel (%p183) target = $region28
        $region27: #{tpu_custom_call.1} parent=23 // pred_region
          %s186 = smul.u32 4, %s21
          %p187 = scmp.lt.s32.totalorder %s186, 7
          %s188 = scalar_select %p187, %s186, 7
          %s189 = smul.addr %s188, 8
          %s190 = scalar_lea.vmem %s0, %s189
          %s191 = smul.u32 4, %s21
        $region28: #{tpu_custom_call.1} parent=23 // pred_fallthru
          _
        // Predicated region
        $region29: #{tpu_custom_call.1} parent=23 // pred_check
          %p192 = pneg %p74
        $region30: #{tpu_custom_call.1} parent=23 // pred_check_branch
          %194 = sbr.rel (%p192) target = $region32
        $region31: #{tpu_custom_call.1} parent=23 // pred_region
          %s195 = smul.u32 4, %s21
          %p196 = scmp.lt.s32.totalorder %s22, 0
          %s197 = scalar_select %p196, %s22, 0
          %p198 = scmp.lt.s32.totalorder %s195, 7
          %s199 = scalar_select %p198, %s195, 7
          %s200 = smul.addr %s197, 8
          %s201 = sadd.s32 %s199, %s200
          %s202 = smul.addr %s201, 8
          %s203 = scalar_lea.vmem %s1, %s202
          %s204 = smul.u32 4, %s21
        $region32: #{tpu_custom_call.1} parent=23 // pred_fallthru
          _
      $region24: #{tpu_custom_call.1} parent=5 // pred_fallthru
        _
      %p205 = scmp.le.s32.totalorder 1, %s14
      %p206 = scmp.lt.s32.totalorder %s14, 3
      %p207 = pnand %p205, %p206
      %p208 = pneg %p207
      // Predicated region
      $region33: #{tpu_custom_call.1} parent=5 // pred_check
        _
      $region34: #{tpu_custom_call.1} parent=5 // pred_check_branch
        %210 = sbr.rel (%p207) target = $region36
      $region35: #{tpu_custom_call.1} parent=5 // pred_region
        %s211 = ssub.s32 %s14, 1
        // Predicated region
        $region37: #{tpu_custom_call.1} parent=35 // pred_check
          %p212 = pneg %p101
        $region38: #{tpu_custom_call.1} parent=35 // pred_check_branch
          %214 = sbr.rel (%p212) target = $region40
        $region39: #{tpu_custom_call.1} parent=35 // pred_region
          %215 = dma.done [#allocation5], 12288
        $region40: #{tpu_custom_call.1} parent=35 // pred_fallthru
          _
        %s216 = smul.u32 4, %s23
        %p217 = scmp.lt.s32.totalorder %s216, 7
        %s218 = scalar_select %p217, %s216, 7
        %s219 = smul.addr %s218, 8
        %s220 = scalar_lea.vmem %s0, %s219
        %p221 = pneg %p52
        %p222 = pneg %p49
        %s223 = smul.u32 4, %s23
        %p224 = scmp.lt.s32.totalorder %s24, 0
        %s225 = scalar_select %p224, %s24, 0
        %p226 = scmp.lt.s32.totalorder %s223, 7
        %s227 = scalar_select %p226, %s223, 7
        %s228 = smul.addr %s225, 8
        %s229 = sadd.s32 %s227, %s228
        %s230 = smul.addr %s229, 8
        %s231 = scalar_lea.vmem %s1, %s230
        %p232 = pneg %p80
        %p233 = pneg %p77
        %p234 = pneg %p101
        %p235 = pneg %p98
        %p236 = pneg %p122
        %p237 = pneg %p119
        %p238 = pneg %p148
        %p239 = pneg %p145
        %s240 = sand.u32 %s135, 1
        %s241 = scalar_lea.sflag [#allocation6], %s240
        %s242 = sand.u32 %s135, 1
        %s243 = smul.addr %s242, 32
        %s244 = scalar_lea.vmem [#allocation7], %s243
        %s245 = smul.u32 4, %s23
        %p246 = scmp.lt.s32.totalorder %s245, 7
        %s247 = scalar_select %p246, %s245, 7
        %s248 = smul.addr %s247, 8
        %s249 = scalar_lea.vmem %s0, %s248
        %s250 = smul.u32 4, %s23
        %s251 = smul.u32 4, %s23
        %p252 = scmp.lt.s32.totalorder %s24, 0
        %s253 = scalar_select %p252, %s24, 0
        %p254 = scmp.lt.s32.totalorder %s251, 7
        %s255 = scalar_select %p254, %s251, 7
        %s256 = smul.addr %s253, 8
        %s257 = sadd.s32 %s255, %s256
        %s258 = smul.addr %s257, 8
        %s259 = scalar_lea.vmem %s1, %s258
        %s260 = smul.u32 4, %s23
        %s261 = smul.u32 4, %s23
        %p263 = scmp.eq.s32.totalorder %s24, 0
        // Predicated region
        $region41: #{tpu_custom_call.1} parent=35 // pred_check
          %p264 = pneg %p263
        $region42: #{tpu_custom_call.1} parent=35 // pred_check_branch
          %266 = sbr.rel (%p264) target = $region44
        $region43: #{tpu_custom_call.1} parent=35 // pred_region
          %267 = vst [vmem:[#allocation2] sm:$0xff] 0.0
          %268 = vst [vmem:[#allocation2 + $0x8] sm:$0xff] 0.0
          %269 = vst [vmem:[#allocation2 + $0x10] sm:$0xff] 0.0
          %270 = vst [vmem:[#allocation2 + $0x18] sm:$0xff] 0.0
        $region44: #{tpu_custom_call.1} parent=35 // pred_fallthru
          _
        %v271 = vld [vmem:[%s249] sm:$0xff]
        %v272 = vld [vmem:[%s249 + $0x8] sm:$0xff]
        %v273 = vld [vmem:[%s249 + $0x10] sm:$0xff]
        %v274 = vld [vmem:[%s249 + $0x18] sm:$0xff]
        %v275 = vld [vmem:[%s259] sm:$0xff]
        %v276 = vld [vmem:[%s259 + $0x8] sm:$0xff]
        %v277 = vld [vmem:[%s259 + $0x10] sm:$0xff]
        %v278 = vld [vmem:[%s259 + $0x18] sm:$0xff]
        %280 = vset.pattern.permute.xlu0 0
        %281 = vperm.xlu0 %280, %v275
        %v282 = vpop.permute.xlu0 %281
        %285 = vset.pattern.permute.xlu0 0
        %286 = vperm.xlu0 %285, %v276
        %v287 = vpop.permute.xlu0 %286
        %290 = vset.pattern.permute.xlu0 0
        %291 = vperm.xlu0 %290, %v277
        %v292 = vpop.permute.xlu0 %291
        %295 = vset.pattern.permute.xlu0 0
        %296 = vperm.xlu0 %295, %v278
        %v297 = vpop.permute.xlu0 %296
        %v299 = vmul.f32 %v282, %v271
        %v300 = vmul.f32 %v287, %v272
        %v301 = vmul.f32 %v292, %v273
        %v302 = vmul.f32 %v297, %v274
        %v303 = vpack.c.bf16 %v300, %v299
        %v304 = vpack.c.bf16 %v302, %v301
        %305 = vst [vmem:[#allocation3] sm:$0xff] %v303
        %306 = vst [vmem:[#allocation3 + $0x60] sm:$0xff] %v304
        %307 = vset.pattern.permute.xlu0 1
        %308 = vperm.xlu0 %307, %v275
        %v309 = vpop.permute.xlu0 %308
        %311 = vset.pattern.permute.xlu0 1
        %312 = vperm.xlu0 %311, %v276
        %v313 = vpop.permute.xlu0 %312
        %315 = vset.pattern.permute.xlu0 1
        %316 = vperm.xlu0 %315, %v277
        %v317 = vpop.permute.xlu0 %316
        %319 = vset.pattern.permute.xlu0 1
        %320 = vperm.xlu0 %319, %v278
        %v321 = vpop.permute.xlu0 %320
        %v323 = vmul.f32 %v309, %v271
        %v324 = vmul.f32 %v313, %v272
        %v325 = vmul.f32 %v317, %v273
        %v326 = vmul.f32 %v321, %v274
        %v327 = vpack.c.bf16 %v324, %v323
        %v328 = vpack.c.bf16 %v326, %v325
        %329 = vst [vmem:[#allocation3 + $0x8] sm:$0xff] %v327
        %330 = vst [vmem:[#allocation3 + $0x68] sm:$0xff] %v328
        %331 = vset.pattern.permute.xlu0 2
        %332 = vperm.xlu0 %331, %v275
        %v333 = vpop.permute.xlu0 %332
        %335 = vset.pattern.permute.xlu0 2
        %336 = vperm.xlu0 %335, %v276
        %v337 = vpop.permute.xlu0 %336
        %339 = vset.pattern.permute.xlu0 2
        %340 = vperm.xlu0 %339, %v277
        %v341 = vpop.permute.xlu0 %340
        %343 = vset.pattern.permute.xlu0 2
        %344 = vperm.xlu0 %343, %v278
        %v345 = vpop.permute.xlu0 %344
        %v347 = vmul.f32 %v333, %v271
        %v348 = vmul.f32 %v337, %v272
        %v349 = vmul.f32 %v341, %v273
        %v350 = vmul.f32 %v345, %v274
        %v351 = vpack.c.bf16 %v348, %v347
        %v352 = vpack.c.bf16 %v350, %v349
        %353 = vst [vmem:[#allocation3 + $0x10] sm:$0xff] %v351
        %354 = vst [vmem:[#allocation3 + $0x70] sm:$0xff] %v352
        %355 = vset.pattern.permute.xlu0 3
        %356 = vperm.xlu0 %355, %v275
        %v357 = vpop.permute.xlu0 %356
        %359 = vset.pattern.permute.xlu0 3
        %360 = vperm.xlu0 %359, %v276
        %v361 = vpop.permute.xlu0 %360
        %363 = vset.pattern.permute.xlu0 3
        %364 = vperm.xlu0 %363, %v277
        %v365 = vpop.permute.xlu0 %364
        %367 = vset.pattern.permute.xlu0 3
        %368 = vperm.xlu0 %367, %v278
        %v369 = vpop.permute.xlu0 %368
        %v371 = vmul.f32 %v357, %v271
        %v372 = vmul.f32 %v361, %v272
        %v373 = vmul.f32 %v365, %v273
        %v374 = vmul.f32 %v369, %v274
        %v375 = vpack.c.bf16 %v372, %v371
        %v376 = vpack.c.bf16 %v374, %v373
        %377 = vst [vmem:[#allocation3 + $0x18] sm:$0xff] %v375
        %378 = vst [vmem:[#allocation3 + $0x78] sm:$0xff] %v376
        %379 = vset.pattern.permute.xlu0 4
        %380 = vperm.xlu0 %379, %v275
        %v381 = vpop.permute.xlu0 %380
        %383 = vset.pattern.permute.xlu0 4
        %384 = vperm.xlu0 %383, %v276
        %v385 = vpop.permute.xlu0 %384
        %387 = vset.pattern.permute.xlu0 4
        %388 = vperm.xlu0 %387, %v277
        %v389 = vpop.permute.xlu0 %388
        %391 = vset.pattern.permute.xlu0 4
        %392 = vperm.xlu0 %391, %v278
        %v393 = vpop.permute.xlu0 %392
        %v395 = vmul.f32 %v381, %v271
        %v396 = vmul.f32 %v385, %v272
        %v397 = vmul.f32 %v389, %v273
        %v398 = vmul.f32 %v393, %v274
        %v399 = vpack.c.bf16 %v396, %v395
        %v400 = vpack.c.bf16 %v398, %v397
        %401 = vst [vmem:[#allocation3 + $0x20] sm:$0xff] %v399
        %402 = vst [vmem:[#allocation3 + $0x80] sm:$0xff] %v400
        %403 = vset.pattern.permute.xlu0 5
        %404 = vperm.xlu0 %403, %v275
        %v405 = vpop.permute.xlu0 %404
        %407 = vset.pattern.permute.xlu0 5
        %408 = vperm.xlu0 %407, %v276
        %v409 = vpop.permute.xlu0 %408
        %411 = vset.pattern.permute.xlu0 5
        %412 = vperm.xlu0 %411, %v277
        %v413 = vpop.permute.xlu0 %412
        %415 = vset.pattern.permute.xlu0 5
        %416 = vperm.xlu0 %415, %v278
        %v417 = vpop.permute.xlu0 %416
        %v419 = vmul.f32 %v405, %v271
        %v420 = vmul.f32 %v409, %v272
        %v421 = vmul.f32 %v413, %v273
        %v422 = vmul.f32 %v417, %v274
        %v423 = vpack.c.bf16 %v420, %v419
        %v424 = vpack.c.bf16 %v422, %v421
        %425 = vst [vmem:[#allocation3 + $0x28] sm:$0xff] %v423
        %426 = vst [vmem:[#allocation3 + $0x88] sm:$0xff] %v424
        %427 = vset.pattern.permute.xlu0 6
        %428 = vperm.xlu0 %427, %v275
        %v429 = vpop.permute.xlu0 %428
        %431 = vset.pattern.permute.xlu0 6
        %432 = vperm.xlu0 %431, %v276
        %v433 = vpop.permute.xlu0 %432
        %435 = vset.pattern.permute.xlu0 6
        %436 = vperm.xlu0 %435, %v277
        %v437 = vpop.permute.xlu0 %436
        %439 = vset.pattern.permute.xlu0 6
        %440 = vperm.xlu0 %439, %v278
        %v441 = vpop.permute.xlu0 %440
        %v443 = vmul.f32 %v429, %v271
        %v444 = vmul.f32 %v433, %v272
        %v445 = vmul.f32 %v437, %v273
        %v446 = vmul.f32 %v441, %v274
        %v447 = vpack.c.bf16 %v444, %v443
        %v448 = vpack.c.bf16 %v446, %v445
        %449 = vst [vmem:[#allocation3 + $0x30] sm:$0xff] %v447
        %450 = vst [vmem:[#allocation3 + $0x90] sm:$0xff] %v448
        %451 = vset.pattern.permute.xlu0 7
        %452 = vperm.xlu0 %451, %v275
        %v453 = vpop.permute.xlu0 %452
        %455 = vset.pattern.permute.xlu0 7
        %456 = vperm.xlu0 %455, %v276
        %v457 = vpop.permute.xlu0 %456
        %459 = vset.pattern.permute.xlu0 7
        %460 = vperm.xlu0 %459, %v277
        %v461 = vpop.permute.xlu0 %460
        %463 = vset.pattern.permute.xlu0 7
        %464 = vperm.xlu0 %463, %v278
        %v465 = vpop.permute.xlu0 %464
        %v467 = vmul.f32 %v453, %v271
        %v468 = vmul.f32 %v457, %v272
        %v469 = vmul.f32 %v461, %v273
        %v470 = vmul.f32 %v465, %v274
        %v471 = vpack.c.bf16 %v468, %v467
        %v472 = vpack.c.bf16 %v470, %v469
        %473 = vst [vmem:[#allocation3 + $0x38] sm:$0xff] %v471
        %474 = vst [vmem:[#allocation3 + $0x98] sm:$0xff] %v472
        %475 = vset.pattern.permute.xlu0 8
        %476 = vperm.xlu0 %475, %v275
        %v477 = vpop.permute.xlu0 %476
        %479 = vset.pattern.permute.xlu0 8
        %480 = vperm.xlu0 %479, %v276
        %v481 = vpop.permute.xlu0 %480
        %483 = vset.pattern.permute.xlu0 8
        %484 = vperm.xlu0 %483, %v277
        %v485 = vpop.permute.xlu0 %484
        %487 = vset.pattern.permute.xlu0 8
        %488 = vperm.xlu0 %487, %v278
        %v489 = vpop.permute.xlu0 %488
        %v491 = vmul.f32 %v477, %v271
        %v492 = vmul.f32 %v481, %v272
        %v493 = vmul.f32 %v485, %v273
        %v494 = vmul.f32 %v489, %v274
        %v495 = vpack.c.bf16 %v492, %v491
        %v496 = vpack.c.bf16 %v494, %v493
        %497 = vst [vmem:[#allocation3 + $0x40] sm:$0xff] %v495
        %498 = vst [vmem:[#allocation3 + $0xa0] sm:$0xff] %v496
        %499 = vset.pattern.permute.xlu0 9
        %500 = vperm.xlu0 %499, %v275
        %v501 = vpop.permute.xlu0 %500
        %503 = vset.pattern.permute.xlu0 9
        %504 = vperm.xlu0 %503, %v276
        %v505 = vpop.permute.xlu0 %504
        %507 = vset.pattern.permute.xlu0 9
        %508 = vperm.xlu0 %507, %v277
        %v509 = vpop.permute.xlu0 %508
        %511 = vset.pattern.permute.xlu0 9
        %512 = vperm.xlu0 %511, %v278
        %v513 = vpop.permute.xlu0 %512
        %v515 = vmul.f32 %v501, %v271
        %v516 = vmul.f32 %v505, %v272
        %v517 = vmul.f32 %v509, %v273
        %v518 = vmul.f32 %v513, %v274
        %v519 = vpack.c.bf16 %v516, %v515
        %v520 = vpack.c.bf16 %v518, %v517
        %521 = vst [vmem:[#allocation3 + $0x48] sm:$0xff] %v519
        %522 = vst [vmem:[#allocation3 + $0xa8] sm:$0xff] %v520
        %523 = vset.pattern.permute.xlu0 10
        %524 = vperm.xlu0 %523, %v275
        %v525 = vpop.permute.xlu0 %524
        %527 = vset.pattern.permute.xlu0 10
        %528 = vperm.xlu0 %527, %v276
        %v529 = vpop.permute.xlu0 %528
        %531 = vset.pattern.permute.xlu0 10
        %532 = vperm.xlu0 %531, %v277
        %v533 = vpop.permute.xlu0 %532
        %535 = vset.pattern.permute.xlu0 10
        %536 = vperm.xlu0 %535, %v278
        %v537 = vpop.permute.xlu0 %536
        %v539 = vmul.f32 %v525, %v271
        %v540 = vmul.f32 %v529, %v272
        %v541 = vmul.f32 %v533, %v273
        %v542 = vmul.f32 %v537, %v274
        %v543 = vpack.c.bf16 %v540, %v539
        %v544 = vpack.c.bf16 %v542, %v541
        %545 = vst [vmem:[#allocation3 + $0x50] sm:$0xff] %v543
        %546 = vst [vmem:[#allocation3 + $0xb0] sm:$0xff] %v544
        %547 = vset.pattern.permute.xlu0 11
        %548 = vperm.xlu0 %547, %v275
        %v549 = vpop.permute.xlu0 %548
        %551 = vset.pattern.permute.xlu0 11
        %552 = vperm.xlu0 %551, %v276
        %v553 = vpop.permute.xlu0 %552
        %555 = vset.pattern.permute.xlu0 11
        %556 = vperm.xlu0 %555, %v277
        %v557 = vpop.permute.xlu0 %556
        %559 = vset.pattern.permute.xlu0 11
        %560 = vperm.xlu0 %559, %v278
        %v561 = vpop.permute.xlu0 %560
        %v563 = vmul.f32 %v549, %v271
        %v564 = vmul.f32 %v553, %v272
        %v565 = vmul.f32 %v557, %v273
        %v566 = vmul.f32 %v561, %v274
        %v567 = vpack.c.bf16 %v564, %v563
        %v568 = vpack.c.bf16 %v566, %v565
        %569 = vst [vmem:[#allocation3 + $0x58] sm:$0xff] %v567
        %570 = vst [vmem:[#allocation3 + $0xb8] sm:$0xff] %v568
        %v571 = vld [vmem:[#allocation2] sm:$0xff]
        %v572 = vld [vmem:[#allocation2 + $0x8] sm:$0xff]
        %v573 = vld [vmem:[#allocation2 + $0x10] sm:$0xff]
        %v574 = vld [vmem:[#allocation2 + $0x18] sm:$0xff]
        %v575 = vld [vmem:[#allocation3] sm:$0xff]
        %v576 = vld [vmem:[#allocation3 + $0x8] sm:$0xff]
        %v577 = vld [vmem:[#allocation3 + $0x10] sm:$0xff]
        %v578 = vld [vmem:[#allocation3 + $0x18] sm:$0xff]
        %v579 = vld [vmem:[#allocation3 + $0x20] sm:$0xff]
        %v580 = vld [vmem:[#allocation3 + $0x28] sm:$0xff]
        %v581 = vld [vmem:[#allocation3 + $0x30] sm:$0xff]
        %v582 = vld [vmem:[#allocation3 + $0x38] sm:$0xff]
        %v583 = vld [vmem:[#allocation3 + $0x40] sm:$0xff]
        %v584 = vld [vmem:[#allocation3 + $0x48] sm:$0xff]
        %v585 = vld [vmem:[#allocation3 + $0x50] sm:$0xff]
        %v586 = vld [vmem:[#allocation3 + $0x58] sm:$0xff]
        %v587 = vld [vmem:[#allocation3 + $0x60] sm:$0xff]
        %v588 = vld [vmem:[#allocation3 + $0x68] sm:$0xff]
        %v589 = vld [vmem:[#allocation3 + $0x70] sm:$0xff]
        %v590 = vld [vmem:[#allocation3 + $0x78] sm:$0xff]
        %v591 = vld [vmem:[#allocation3 + $0x80] sm:$0xff]
        %v592 = vld [vmem:[#allocation3 + $0x88] sm:$0xff]
        %v593 = vld [vmem:[#allocation3 + $0x90] sm:$0xff]
        %v594 = vld [vmem:[#allocation3 + $0x98] sm:$0xff]
        %v595 = vld [vmem:[#allocation3 + $0xa0] sm:$0xff]
        %v596 = vld [vmem:[#allocation3 + $0xa8] sm:$0xff]
        %v597 = vld [vmem:[#allocation3 + $0xb0] sm:$0xff]
        %v598 = vld [vmem:[#allocation3 + $0xb8] sm:$0xff]
        %v599 = vld [vmem:[#allocation4] sm:$0xf]
        %v600 = vld [vmem:[#allocation4 + $0x4] sm:$0xf]
        %v601 = vld [vmem:[#allocation4 + $0x8] sm:$0xf]
        %v602 = vld [vmem:[#allocation4 + $0xc] sm:$0xf]
        %v603 = vld [vmem:[#allocation4 + $0x10] sm:$0xf]
        %v604 = vld [vmem:[#allocation4 + $0x14] sm:$0xf]
        %v605 = vld [vmem:[#allocation4 + $0x18] sm:$0xf]
        %v606 = vld [vmem:[#allocation4 + $0x1c] sm:$0xf]
        %v607 = vld [vmem:[#allocation4 + $0x20] sm:$0xf]
        %v608 = vld [vmem:[#allocation4 + $0x24] sm:$0xf]
        %v609 = vld [vmem:[#allocation4 + $0x28] sm:$0xf]
        %v610 = vld [vmem:[#allocation4 + $0x2c] sm:$0xf]
        %v611 = vld [vmem:[#allocation4 + $0x30] sm:$0xf]
        %v612 = vld [vmem:[#allocation4 + $0x34] sm:$0xf]
        %v613 = vld [vmem:[#allocation4 + $0x38] sm:$0xf]
        %v614 = vld [vmem:[#allocation4 + $0x3c] sm:$0xf]
        %v615 = vld [vmem:[#allocation4 + $0x40] sm:$0xf]
        %v616 = vld [vmem:[#allocation4 + $0x44] sm:$0xf]
        %v617 = vld [vmem:[#allocation4 + $0x48] sm:$0xf]
        %v618 = vld [vmem:[#allocation4 + $0x4c] sm:$0xf]
        %v619 = vld [vmem:[#allocation4 + $0x50] sm:$0xf]
        %v620 = vld [vmem:[#allocation4 + $0x54] sm:$0xf]
        %v621 = vld [vmem:[#allocation4 + $0x58] sm:$0xf]
        %v622 = vld [vmem:[#allocation4 + $0x5c] sm:$0xf]
        %v623 = vld [vmem:[#allocation4 + $0x60] sm:$0xf]
        %v624 = vld [vmem:[#allocation4 + $0x64] sm:$0xf]
        %v625 = vld [vmem:[#allocation4 + $0x68] sm:$0xf]
        %v626 = vld [vmem:[#allocation4 + $0x6c] sm:$0xf]
        %v627 = vld [vmem:[#allocation4 + $0x70] sm:$0xf]
        %v628 = vld [vmem:[#allocation4 + $0x74] sm:$0xf]
        %v629 = vld [vmem:[#allocation4 + $0x78] sm:$0xf]
        %v630 = vld [vmem:[#allocation4 + $0x7c] sm:$0xf]
        %v631 = vld [vmem:[#allocation4 + $0x80] sm:$0xf]
        %v632 = vld [vmem:[#allocation4 + $0x84] sm:$0xf]
        %v633 = vld [vmem:[#allocation4 + $0x88] sm:$0xf]
        %v634 = vld [vmem:[#allocation4 + $0x8c] sm:$0xf]
        %v635 = vld [vmem:[#allocation4 + $0x90] sm:$0xf]
        %v636 = vld [vmem:[#allocation4 + $0x94] sm:$0xf]
        %v637 = vld [vmem:[#allocation4 + $0x98] sm:$0xf]
        %v638 = vld [vmem:[#allocation4 + $0x9c] sm:$0xf]
        %v639 = vld [vmem:[#allocation4 + $0xa0] sm:$0xf]
        %v640 = vld [vmem:[#allocation4 + $0xa4] sm:$0xf]
        %v641 = vld [vmem:[#allocation4 + $0xa8] sm:$0xf]
        %v642 = vld [vmem:[#allocation4 + $0xac] sm:$0xf]
        %v643 = vld [vmem:[#allocation4 + $0xb0] sm:$0xf]
        %v644 = vld [vmem:[#allocation4 + $0xb4] sm:$0xf]
        %v645 = vld [vmem:[#allocation4 + $0xb8] sm:$0xf]
        %v646 = vld [vmem:[#allocation4 + $0xbc] sm:$0xf]
        %v647 = vld [vmem:[#allocation4 + $0xc0] sm:$0xf]
        %v648 = vld [vmem:[#allocation4 + $0xc4] sm:$0xf]
        %v649 = vld [vmem:[#allocation4 + $0xc8] sm:$0xf]
        %v650 = vld [vmem:[#allocation4 + $0xcc] sm:$0xf]
        %v651 = vld [vmem:[#allocation4 + $0xd0] sm:$0xf]
        %v652 = vld [vmem:[#allocation4 + $0xd4] sm:$0xf]
        %v653 = vld [vmem:[#allocation4 + $0xd8] sm:$0xf]
        %v654 = vld [vmem:[#allocation4 + $0xdc] sm:$0xf]
        %v655 = vld [vmem:[#allocation4 + $0xe0] sm:$0xf]
        %v656 = vld [vmem:[#allocation4 + $0xe4] sm:$0xf]
        %v657 = vld [vmem:[#allocation4 + $0xe8] sm:$0xf]
        %v658 = vld [vmem:[#allocation4 + $0xec] sm:$0xf]
        %v659 = vld [vmem:[#allocation4 + $0xf0] sm:$0xf]
        %v660 = vld [vmem:[#allocation4 + $0xf4] sm:$0xf]
        %v661 = vld [vmem:[#allocation4 + $0xf8] sm:$0xf]
        %v662 = vld [vmem:[#allocation4 + $0xfc] sm:$0xf]
        %v663 = vld [vmem:[#allocation4 + $0x100] sm:$0xf]
        %v664 = vld [vmem:[#allocation4 + $0x104] sm:$0xf]
        %v665 = vld [vmem:[#allocation4 + $0x108] sm:$0xf]
        %v666 = vld [vmem:[#allocation4 + $0x10c] sm:$0xf]
        %v667 = vld [vmem:[#allocation4 + $0x110] sm:$0xf]
        %v668 = vld [vmem:[#allocation4 + $0x114] sm:$0xf]
        %v669 = vld [vmem:[#allocation4 + $0x118] sm:$0xf]
        %v670 = vld [vmem:[#allocation4 + $0x11c] sm:$0xf]
        %v671 = vld [vmem:[#allocation4 + $0x120] sm:$0xf]
        %v672 = vld [vmem:[#allocation4 + $0x124] sm:$0xf]
        %v673 = vld [vmem:[#allocation4 + $0x128] sm:$0xf]
        %v674 = vld [vmem:[#allocation4 + $0x12c] sm:$0xf]
        %v675 = vld [vmem:[#allocation4 + $0x130] sm:$0xf]
        %v676 = vld [vmem:[#allocation4 + $0x134] sm:$0xf]
        %v677 = vld [vmem:[#allocation4 + $0x138] sm:$0xf]
        %v678 = vld [vmem:[#allocation4 + $0x13c] sm:$0xf]
        %v679 = vld [vmem:[#allocation4 + $0x140] sm:$0xf]
        %v680 = vld [vmem:[#allocation4 + $0x144] sm:$0xf]
        %v681 = vld [vmem:[#allocation4 + $0x148] sm:$0xf]
        %v682 = vld [vmem:[#allocation4 + $0x14c] sm:$0xf]
        %v683 = vld [vmem:[#allocation4 + $0x150] sm:$0xf]
        %v684 = vld [vmem:[#allocation4 + $0x154] sm:$0xf]
        %v685 = vld [vmem:[#allocation4 + $0x158] sm:$0xf]
        %v686 = vld [vmem:[#allocation4 + $0x15c] sm:$0xf]
        %v687 = vld [vmem:[#allocation4 + $0x160] sm:$0xf]
        %v688 = vld [vmem:[#allocation4 + $0x164] sm:$0xf]
        %v689 = vld [vmem:[#allocation4 + $0x168] sm:$0xf]
        %v690 = vld [vmem:[#allocation4 + $0x16c] sm:$0xf]
        %v691 = vld [vmem:[#allocation4 + $0x170] sm:$0xf]
        %v692 = vld [vmem:[#allocation4 + $0x174] sm:$0xf]
        %v693 = vld [vmem:[#allocation4 + $0x178] sm:$0xf]
        %v694 = vld [vmem:[#allocation4 + $0x17c] sm:$0xf]
        %v695 = vld [vmem:[#allocation4 + $0x180] sm:$0xf]
        %v696 = vld [vmem:[#allocation4 + $0x184] sm:$0xf]
        %v697 = vld [vmem:[#allocation4 + $0x188] sm:$0xf]
        %v698 = vld [vmem:[#allocation4 + $0x18c] sm:$0xf]
        %v699 = vld [vmem:[#allocation4 + $0x190] sm:$0xf]
        %v700 = vld [vmem:[#allocation4 + $0x194] sm:$0xf]
        %v701 = vld [vmem:[#allocation4 + $0x198] sm:$0xf]
        %v702 = vld [vmem:[#allocation4 + $0x19c] sm:$0xf]
        %v703 = vld [vmem:[#allocation4 + $0x1a0] sm:$0xf]
        %v704 = vld [vmem:[#allocation4 + $0x1a4] sm:$0xf]
        %v705 = vld [vmem:[#allocation4 + $0x1a8] sm:$0xf]
        %v706 = vld [vmem:[#allocation4 + $0x1ac] sm:$0xf]
        %v707 = vld [vmem:[#allocation4 + $0x1b0] sm:$0xf]
        %v708 = vld [vmem:[#allocation4 + $0x1b4] sm:$0xf]
        %v709 = vld [vmem:[#allocation4 + $0x1b8] sm:$0xf]
        %v710 = vld [vmem:[#allocation4 + $0x1bc] sm:$0xf]
        %v711 = vld [vmem:[#allocation4 + $0x1c0] sm:$0xf]
        %v712 = vld [vmem:[#allocation4 + $0x1c4] sm:$0xf]
        %v713 = vld [vmem:[#allocation4 + $0x1c8] sm:$0xf]
        %v714 = vld [vmem:[#allocation4 + $0x1cc] sm:$0xf]
        %v715 = vld [vmem:[#allocation4 + $0x1d0] sm:$0xf]
        %v716 = vld [vmem:[#allocation4 + $0x1d4] sm:$0xf]
        %v717 = vld [vmem:[#allocation4 + $0x1d8] sm:$0xf]
        %v718 = vld [vmem:[#allocation4 + $0x1dc] sm:$0xf]
        %v719 = vld [vmem:[#allocation4 + $0x1e0] sm:$0xf]
        %v720 = vld [vmem:[#allocation4 + $0x1e4] sm:$0xf]
        %v721 = vld [vmem:[#allocation4 + $0x1e8] sm:$0xf]
        %v722 = vld [vmem:[#allocation4 + $0x1ec] sm:$0xf]
        %v723 = vld [vmem:[#allocation4 + $0x1f0] sm:$0xf]
        %v724 = vld [vmem:[#allocation4 + $0x1f4] sm:$0xf]
        %v725 = vld [vmem:[#allocation4 + $0x1f8] sm:$0xf]
        %v726 = vld [vmem:[#allocation4 + $0x1fc] sm:$0xf]
        %v727 = vld [vmem:[#allocation4 + $0x200] sm:$0xf]
        %v728 = vld [vmem:[#allocation4 + $0x204] sm:$0xf]
        %v729 = vld [vmem:[#allocation4 + $0x208] sm:$0xf]
        %v730 = vld [vmem:[#allocation4 + $0x20c] sm:$0xf]
        %v731 = vld [vmem:[#allocation4 + $0x210] sm:$0xf]
        %v732 = vld [vmem:[#allocation4 + $0x214] sm:$0xf]
        %v733 = vld [vmem:[#allocation4 + $0x218] sm:$0xf]
        %v734 = vld [vmem:[#allocation4 + $0x21c] sm:$0xf]
        %v735 = vld [vmem:[#allocation4 + $0x220] sm:$0xf]
        %v736 = vld [vmem:[#allocation4 + $0x224] sm:$0xf]
        %v737 = vld [vmem:[#allocation4 + $0x228] sm:$0xf]
        %v738 = vld [vmem:[#allocation4 + $0x22c] sm:$0xf]
        %v739 = vld [vmem:[#allocation4 + $0x230] sm:$0xf]
        %v740 = vld [vmem:[#allocation4 + $0x234] sm:$0xf]
        %v741 = vld [vmem:[#allocation4 + $0x238] sm:$0xf]
        %v742 = vld [vmem:[#allocation4 + $0x23c] sm:$0xf]
        %v743 = vld [vmem:[#allocation4 + $0x240] sm:$0xf]
        %v744 = vld [vmem:[#allocation4 + $0x244] sm:$0xf]
        %v745 = vld [vmem:[#allocation4 + $0x248] sm:$0xf]
        %v746 = vld [vmem:[#allocation4 + $0x24c] sm:$0xf]
        %v747 = vld [vmem:[#allocation4 + $0x250] sm:$0xf]
        %v748 = vld [vmem:[#allocation4 + $0x254] sm:$0xf]
        %v749 = vld [vmem:[#allocation4 + $0x258] sm:$0xf]
        %v750 = vld [vmem:[#allocation4 + $0x25c] sm:$0xf]
        %v751 = vld [vmem:[#allocation4 + $0x260] sm:$0xf]
        %v752 = vld [vmem:[#allocation4 + $0x264] sm:$0xf]
        %v753 = vld [vmem:[#allocation4 + $0x268] sm:$0xf]
        %v754 = vld [vmem:[#allocation4 + $0x26c] sm:$0xf]
        %v755 = vld [vmem:[#allocation4 + $0x270] sm:$0xf]
        %v756 = vld [vmem:[#allocation4 + $0x274] sm:$0xf]
        %v757 = vld [vmem:[#allocation4 + $0x278] sm:$0xf]
        %v758 = vld [vmem:[#allocation4 + $0x27c] sm:$0xf]
        %v759 = vld [vmem:[#allocation4 + $0x280] sm:$0xf]
        %v760 = vld [vmem:[#allocation4 + $0x284] sm:$0xf]
        %v761 = vld [vmem:[#allocation4 + $0x288] sm:$0xf]
        %v762 = vld [vmem:[#allocation4 + $0x28c] sm:$0xf]
        %v763 = vld [vmem:[#allocation4 + $0x290] sm:$0xf]
        %v764 = vld [vmem:[#allocation4 + $0x294] sm:$0xf]
        %v765 = vld [vmem:[#allocation4 + $0x298] sm:$0xf]
        %v766 = vld [vmem:[#allocation4 + $0x29c] sm:$0xf]
        %v767 = vld [vmem:[#allocation4 + $0x2a0] sm:$0xf]
        %v768 = vld [vmem:[#allocation4 + $0x2a4] sm:$0xf]
        %v769 = vld [vmem:[#allocation4 + $0x2a8] sm:$0xf]
        %v770 = vld [vmem:[#allocation4 + $0x2ac] sm:$0xf]
        %v771 = vld [vmem:[#allocation4 + $0x2b0] sm:$0xf]
        %v772 = vld [vmem:[#allocation4 + $0x2b4] sm:$0xf]
        %v773 = vld [vmem:[#allocation4 + $0x2b8] sm:$0xf]
        %v774 = vld [vmem:[#allocation4 + $0x2bc] sm:$0xf]
        %v775 = vld [vmem:[#allocation4 + $0x2c0] sm:$0xf]
        %v776 = vld [vmem:[#allocation4 + $0x2c4] sm:$0xf]
        %v777 = vld [vmem:[#allocation4 + $0x2c8] sm:$0xf]
        %v778 = vld [vmem:[#allocation4 + $0x2cc] sm:$0xf]
        %v779 = vld [vmem:[#allocation4 + $0x2d0] sm:$0xf]
        %v780 = vld [vmem:[#allocation4 + $0x2d4] sm:$0xf]
        %v781 = vld [vmem:[#allocation4 + $0x2d8] sm:$0xf]
        %v782 = vld [vmem:[#allocation4 + $0x2dc] sm:$0xf]
        %v783 = vld [vmem:[#allocation4 + $0x2e0] sm:$0xf]
        %v784 = vld [vmem:[#allocation4 + $0x2e4] sm:$0xf]
        %v785 = vld [vmem:[#allocation4 + $0x2e8] sm:$0xf]
        %v786 = vld [vmem:[#allocation4 + $0x2ec] sm:$0xf]
        %v787 = vld [vmem:[#allocation4 + $0x2f0] sm:$0xf]
        %v788 = vld [vmem:[#allocation4 + $0x2f4] sm:$0xf]
        %v789 = vld [vmem:[#allocation4 + $0x2f8] sm:$0xf]
        %v790 = vld [vmem:[#allocation4 + $0x2fc] sm:$0xf]
        %v983 = vunpack.c.l.b16 %v599
        %v984 = vunpack.c.l.b16 %v600
        %v985 = vunpack.c.l.b16 %v601
        %v986 = vunpack.c.l.b16 %v602
        %v987 = vunpack.c.l.b16 %v603
        %v988 = vunpack.c.l.b16 %v604
        %v989 = vunpack.c.l.b16 %v605
        %v990 = vunpack.c.l.b16 %v606
        %v991 = vunpack.c.l.b16 %v607
        %v992 = vunpack.c.l.b16 %v608
        %v993 = vunpack.c.l.b16 %v609
        %v994 = vunpack.c.l.b16 %v610
        %v995 = vunpack.c.l.b16 %v611
        %v996 = vunpack.c.l.b16 %v612
        %v997 = vunpack.c.l.b16 %v613
        %v998 = vunpack.c.l.b16 %v614
        %v999 = vunpack.c.l.b16 %v615
        %v1000 = vunpack.c.l.b16 %v616
        %v1001 = vunpack.c.l.b16 %v617
        %v1002 = vunpack.c.l.b16 %v618
        %v1003 = vunpack.c.l.b16 %v619
        %v1004 = vunpack.c.l.b16 %v620
        %v1005 = vunpack.c.l.b16 %v621
        %v1006 = vunpack.c.l.b16 %v622
        %v1007 = vunpack.c.l.b16 %v623
        %v1008 = vunpack.c.l.b16 %v624
        %v1009 = vunpack.c.l.b16 %v625
        %v1010 = vunpack.c.l.b16 %v626
        %v1011 = vunpack.c.l.b16 %v627
        %v1012 = vunpack.c.l.b16 %v628
        %v1013 = vunpack.c.l.b16 %v629
        %v1014 = vunpack.c.l.b16 %v630
        %v1015 = vunpack.c.l.b16 %v631
        %v1016 = vunpack.c.l.b16 %v632
        %v1017 = vunpack.c.l.b16 %v633
        %v1018 = vunpack.c.l.b16 %v634
        %v1019 = vunpack.c.l.b16 %v635
        %v1020 = vunpack.c.l.b16 %v636
        %v1021 = vunpack.c.l.b16 %v637
        %v1022 = vunpack.c.l.b16 %v638
        %v1023 = vunpack.c.l.b16 %v639
        %v1024 = vunpack.c.l.b16 %v640
        %v1025 = vunpack.c.l.b16 %v641
        %v1026 = vunpack.c.l.b16 %v642
        %v1027 = vunpack.c.l.b16 %v643
        %v1028 = vunpack.c.l.b16 %v644
        %v1029 = vunpack.c.l.b16 %v645
        %v1030 = vunpack.c.l.b16 %v646
        %v1031 = vunpack.c.l.b16 %v647
        %v1032 = vunpack.c.l.b16 %v648
        %v1033 = vunpack.c.l.b16 %v649
        %v1034 = vunpack.c.l.b16 %v650
        %v1035 = vunpack.c.l.b16 %v651
        %v1036 = vunpack.c.l.b16 %v652
        %v1037 = vunpack.c.l.b16 %v653
        %v1038 = vunpack.c.l.b16 %v654
        %v1039 = vunpack.c.l.b16 %v655
        %v1040 = vunpack.c.l.b16 %v656
        %v1041 = vunpack.c.l.b16 %v657
        %v1042 = vunpack.c.l.b16 %v658
        %v1043 = vunpack.c.l.b16 %v659
        %v1044 = vunpack.c.l.b16 %v660
        %v1045 = vunpack.c.l.b16 %v661
        %v1046 = vunpack.c.l.b16 %v662
        %v1047 = vunpack.c.l.b16 %v663
        %v1048 = vunpack.c.l.b16 %v664
        %v1049 = vunpack.c.l.b16 %v665
        %v1050 = vunpack.c.l.b16 %v666
        %v1051 = vunpack.c.l.b16 %v667
        %v1052 = vunpack.c.l.b16 %v668
        %v1053 = vunpack.c.l.b16 %v669
        %v1054 = vunpack.c.l.b16 %v670
        %v1055 = vunpack.c.l.b16 %v671
        %v1056 = vunpack.c.l.b16 %v672
        %v1057 = vunpack.c.l.b16 %v673
        %v1058 = vunpack.c.l.b16 %v674
        %v1059 = vunpack.c.l.b16 %v675
        %v1060 = vunpack.c.l.b16 %v676
        %v1061 = vunpack.c.l.b16 %v677
        %v1062 = vunpack.c.l.b16 %v678
        %v1063 = vunpack.c.l.b16 %v679
        %v1064 = vunpack.c.l.b16 %v680
        %v1065 = vunpack.c.l.b16 %v681
        %v1066 = vunpack.c.l.b16 %v682
        %v1067 = vunpack.c.l.b16 %v683
        %v1068 = vunpack.c.l.b16 %v684
        %v1069 = vunpack.c.l.b16 %v685
        %v1070 = vunpack.c.l.b16 %v686
        %v1071 = vunpack.c.l.b16 %v687
        %v1072 = vunpack.c.l.b16 %v688
        %v1073 = vunpack.c.l.b16 %v689
        %v1074 = vunpack.c.l.b16 %v690
        %v1075 = vunpack.c.l.b16 %v691
        %v1076 = vunpack.c.l.b16 %v692
        %v1077 = vunpack.c.l.b16 %v693
        %v1078 = vunpack.c.l.b16 %v694
        %v1079 = vunpack.c.l.b16 %v695
        %v1080 = vunpack.c.l.b16 %v696
        %v1081 = vunpack.c.l.b16 %v697
        %v1082 = vunpack.c.l.b16 %v698
        %v1083 = vunpack.c.l.b16 %v699
        %v1084 = vunpack.c.l.b16 %v700
        %v1085 = vunpack.c.l.b16 %v701
        %v1086 = vunpack.c.l.b16 %v702
        %v1087 = vunpack.c.l.b16 %v703
        %v1088 = vunpack.c.l.b16 %v704
        %v1089 = vunpack.c.l.b16 %v705
        %v1090 = vunpack.c.l.b16 %v706
        %v1091 = vunpack.c.l.b16 %v707
        %v1092 = vunpack.c.l.b16 %v708
        %v1093 = vunpack.c.l.b16 %v709
        %v1094 = vunpack.c.l.b16 %v710
        %v1095 = vunpack.c.l.b16 %v711
        %v1096 = vunpack.c.l.b16 %v712
        %v1097 = vunpack.c.l.b16 %v713
        %v1098 = vunpack.c.l.b16 %v714
        %v1099 = vunpack.c.l.b16 %v715
        %v1100 = vunpack.c.l.b16 %v716
        %v1101 = vunpack.c.l.b16 %v717
        %v1102 = vunpack.c.l.b16 %v718
        %v1103 = vunpack.c.l.b16 %v719
        %v1104 = vunpack.c.l.b16 %v720
        %v1105 = vunpack.c.l.b16 %v721
        %v1106 = vunpack.c.l.b16 %v722
        %v1107 = vunpack.c.l.b16 %v723
        %v1108 = vunpack.c.l.b16 %v724
        %v1109 = vunpack.c.l.b16 %v725
        %v1110 = vunpack.c.l.b16 %v726
        %v1111 = vunpack.c.l.b16 %v727
        %v1112 = vunpack.c.l.b16 %v728
        %v1113 = vunpack.c.l.b16 %v729
        %v1114 = vunpack.c.l.b16 %v730
        %v1115 = vunpack.c.l.b16 %v731
        %v1116 = vunpack.c.l.b16 %v732
        %v1117 = vunpack.c.l.b16 %v733
        %v1118 = vunpack.c.l.b16 %v734
        %v1119 = vunpack.c.l.b16 %v735
        %v1120 = vunpack.c.l.b16 %v736
        %v1121 = vunpack.c.l.b16 %v737
        %v1122 = vunpack.c.l.b16 %v738
        %v1123 = vunpack.c.l.b16 %v739
        %v1124 = vunpack.c.l.b16 %v740
        %v1125 = vunpack.c.l.b16 %v741
        %v1126 = vunpack.c.l.b16 %v742
        %v1127 = vunpack.c.l.b16 %v743
        %v1128 = vunpack.c.l.b16 %v744
        %v1129 = vunpack.c.l.b16 %v745
        %v1130 = vunpack.c.l.b16 %v746
        %v1131 = vunpack.c.l.b16 %v747
        %v1132 = vunpack.c.l.b16 %v748
        %v1133 = vunpack.c.l.b16 %v749
        %v1134 = vunpack.c.l.b16 %v750
        %v1135 = vunpack.c.l.b16 %v751
        %v1136 = vunpack.c.l.b16 %v752
        %v1137 = vunpack.c.l.b16 %v753
        %v1138 = vunpack.c.l.b16 %v754
        %v1139 = vunpack.c.l.b16 %v755
        %v1140 = vunpack.c.l.b16 %v756
        %v1141 = vunpack.c.l.b16 %v757
        %v1142 = vunpack.c.l.b16 %v758
        %v1143 = vunpack.c.l.b16 %v759
        %v1144 = vunpack.c.l.b16 %v760
        %v1145 = vunpack.c.l.b16 %v761
        %v1146 = vunpack.c.l.b16 %v762
        %v1147 = vunpack.c.l.b16 %v763
        %v1148 = vunpack.c.l.b16 %v764
        %v1149 = vunpack.c.l.b16 %v765
        %v1150 = vunpack.c.l.b16 %v766
        %v1151 = vunpack.c.l.b16 %v767
        %v1152 = vunpack.c.l.b16 %v768
        %v1153 = vunpack.c.l.b16 %v769
        %v1154 = vunpack.c.l.b16 %v770
        %v1155 = vunpack.c.l.b16 %v771
        %v1156 = vunpack.c.l.b16 %v772
        %v1157 = vunpack.c.l.b16 %v773
        %v1158 = vunpack.c.l.b16 %v774
        %v1159 = vunpack.c.l.b16 %v775
        %v1160 = vunpack.c.l.b16 %v776
        %v1161 = vunpack.c.l.b16 %v777
        %v1162 = vunpack.c.l.b16 %v778
        %v1163 = vunpack.c.l.b16 %v779
        %v1164 = vunpack.c.l.b16 %v780
        %v1165 = vunpack.c.l.b16 %v781
        %v1166 = vunpack.c.l.b16 %v782
        %v1167 = vunpack.c.l.b16 %v783
        %v1168 = vunpack.c.l.b16 %v784
        %v1169 = vunpack.c.l.b16 %v785
        %v1170 = vunpack.c.l.b16 %v786
        %v1171 = vunpack.c.l.b16 %v787
        %v1172 = vunpack.c.l.b16 %v788
        %v1173 = vunpack.c.l.b16 %v789
        %v1174 = vunpack.c.l.b16 %v790
        %v1175 = vpack.c.b16 %v984, %v983
        %v1176 = vpack.c.b16 %v986, %v985
        %v1177 = vpack.c.b16 %v988, %v987
        %v1178 = vpack.c.b16 %v990, %v989
        %v1179 = vpack.c.b16 %v992, %v991
        %v1180 = vpack.c.b16 %v994, %v993
        %v1181 = vpack.c.b16 %v996, %v995
        %v1182 = vpack.c.b16 %v998, %v997
        %v1183 = vpack.c.b16 %v1000, %v999
        %v1184 = vpack.c.b16 %v1002, %v1001
        %v1185 = vpack.c.b16 %v1004, %v1003
        %v1186 = vpack.c.b16 %v1006, %v1005
        %v1187 = vpack.c.b16 %v1008, %v1007
        %v1188 = vpack.c.b16 %v1010, %v1009
        %v1189 = vpack.c.b16 %v1012, %v1011
        %v1190 = vpack.c.b16 %v1014, %v1013
        %v1191 = vpack.c.b16 %v1016, %v1015
        %v1192 = vpack.c.b16 %v1018, %v1017
        %v1193 = vpack.c.b16 %v1020, %v1019
        %v1194 = vpack.c.b16 %v1022, %v1021
        %v1195 = vpack.c.b16 %v1024, %v1023
        %v1196 = vpack.c.b16 %v1026, %v1025
        %v1197 = vpack.c.b16 %v1028, %v1027
        %v1198 = vpack.c.b16 %v1030, %v1029
        %v1199 = vpack.c.b16 %v1032, %v1031
        %v1200 = vpack.c.b16 %v1034, %v1033
        %v1201 = vpack.c.b16 %v1036, %v1035
        %v1202 = vpack.c.b16 %v1038, %v1037
        %v1203 = vpack.c.b16 %v1040, %v1039
        %v1204 = vpack.c.b16 %v1042, %v1041
        %v1205 = vpack.c.b16 %v1044, %v1043
        %v1206 = vpack.c.b16 %v1046, %v1045
        %v1207 = vpack.c.b16 %v1048, %v1047
        %v1208 = vpack.c.b16 %v1050, %v1049
        %v1209 = vpack.c.b16 %v1052, %v1051
        %v1210 = vpack.c.b16 %v1054, %v1053
        %v1211 = vpack.c.b16 %v1056, %v1055
        %v1212 = vpack.c.b16 %v1058, %v1057
        %v1213 = vpack.c.b16 %v1060, %v1059
        %v1214 = vpack.c.b16 %v1062, %v1061
        %v1215 = vpack.c.b16 %v1064, %v1063
        %v1216 = vpack.c.b16 %v1066, %v1065
        %v1217 = vpack.c.b16 %v1068, %v1067
        %v1218 = vpack.c.b16 %v1070, %v1069
        %v1219 = vpack.c.b16 %v1072, %v1071
        %v1220 = vpack.c.b16 %v1074, %v1073
        %v1221 = vpack.c.b16 %v1076, %v1075
        %v1222 = vpack.c.b16 %v1078, %v1077
        %v1223 = vpack.c.b16 %v1080, %v1079
        %v1224 = vpack.c.b16 %v1082, %v1081
        %v1225 = vpack.c.b16 %v1084, %v1083
        %v1226 = vpack.c.b16 %v1086, %v1085
        %v1227 = vpack.c.b16 %v1088, %v1087
        %v1228 = vpack.c.b16 %v1090, %v1089
        %v1229 = vpack.c.b16 %v1092, %v1091
        %v1230 = vpack.c.b16 %v1094, %v1093
        %v1231 = vpack.c.b16 %v1096, %v1095
        %v1232 = vpack.c.b16 %v1098, %v1097
        %v1233 = vpack.c.b16 %v1100, %v1099
        %v1234 = vpack.c.b16 %v1102, %v1101
        %v1235 = vpack.c.b16 %v1104, %v1103
        %v1236 = vpack.c.b16 %v1106, %v1105
        %v1237 = vpack.c.b16 %v1108, %v1107
        %v1238 = vpack.c.b16 %v1110, %v1109
        %v1239 = vpack.c.b16 %v1112, %v1111
        %v1240 = vpack.c.b16 %v1114, %v1113
        %v1241 = vpack.c.b16 %v1116, %v1115
        %v1242 = vpack.c.b16 %v1118, %v1117
        %v1243 = vpack.c.b16 %v1120, %v1119
        %v1244 = vpack.c.b16 %v1122, %v1121
        %v1245 = vpack.c.b16 %v1124, %v1123
        %v1246 = vpack.c.b16 %v1126, %v1125
        %v1247 = vpack.c.b16 %v1128, %v1127
        %v1248 = vpack.c.b16 %v1130, %v1129
        %v1249 = vpack.c.b16 %v1132, %v1131
        %v1250 = vpack.c.b16 %v1134, %v1133
        %v1251 = vpack.c.b16 %v1136, %v1135
        %v1252 = vpack.c.b16 %v1138, %v1137
        %v1253 = vpack.c.b16 %v1140, %v1139
        %v1254 = vpack.c.b16 %v1142, %v1141
        %v1255 = vpack.c.b16 %v1144, %v1143
        %v1256 = vpack.c.b16 %v1146, %v1145
        %v1257 = vpack.c.b16 %v1148, %v1147
        %v1258 = vpack.c.b16 %v1150, %v1149
        %v1259 = vpack.c.b16 %v1152, %v1151
        %v1260 = vpack.c.b16 %v1154, %v1153
        %v1261 = vpack.c.b16 %v1156, %v1155
        %v1262 = vpack.c.b16 %v1158, %v1157
        %v1263 = vpack.c.b16 %v1160, %v1159
        %v1264 = vpack.c.b16 %v1162, %v1161
        %v1265 = vpack.c.b16 %v1164, %v1163
        %v1266 = vpack.c.b16 %v1166, %v1165
        %v1267 = vpack.c.b16 %v1168, %v1167
        %v1268 = vpack.c.b16 %v1170, %v1169
        %v1269 = vpack.c.b16 %v1172, %v1171
        %v1270 = vpack.c.b16 %v1174, %v1173
        %1367 = vmatprep.subr.bf16.mxu0 0
        %1368 = vmatpush1.bf16.msra.mxu0 %v1175
        %1369 = vmatprep.subr.bf16.mxu0 0
        %1370 = vmatpush1.bf16.msra.mxu0 %v1176
        %1371 = vmatprep.subr.bf16.mxu0 0
        %1372 = vmatpush1.bf16.msra.mxu0 %v1177
        %1373 = vmatprep.subr.bf16.mxu0 0
        %1374 = vmatpush1.bf16.msra.mxu0 %v1178
        %1375 = vmatprep.subr.bf16.mxu0 0
        %1376 = vmatpush1.bf16.msra.mxu0 %v1179
        %1377 = vmatprep.subr.bf16.mxu0 0
        %1378 = vmatpush1.bf16.msra.mxu0 %v1180
        %1379 = vmatprep.subr.bf16.mxu0 0
        %1380 = vmatpush1.bf16.msra.mxu0 %v1181
        %1381 = vmatprep.subr.bf16.mxu0 0
        %1382 = vmatpush1.bf16.msra.mxu0 %v1182
        %1383 = vmatprep.subr.bf16.mxu0 0
        %1384 = vmatpush1.bf16.msra.mxu0 %v1183
        %1385 = vmatprep.subr.bf16.mxu0 0
        %1386 = vmatpush1.bf16.msra.mxu0 %v1184
        %1387 = vmatprep.subr.bf16.mxu0 0
        %1388 = vmatpush1.bf16.msra.mxu0 %v1185
        %1389 = vmatprep.subr.bf16.mxu0 0
        %1390 = vmatpush1.bf16.msra.mxu0 %v1186
        %1391 = vmatprep.subr.bf16.mxu0 0
        %1392 = vmatpush1.bf16.msra.mxu0 %v1187
        %1393 = vmatprep.subr.bf16.mxu0 0
        %1394 = vmatpush1.bf16.msra.mxu0 %v1188
        %1395 = vmatprep.subr.bf16.mxu0 0
        %1396 = vmatpush1.bf16.msra.mxu0 %v1189
        %1397 = vmatprep.subr.bf16.mxu0 0
        %1398 = vmatpush1.bf16.msra.mxu0 %v1190
        %1399 = vmatprep.mubr.bf16.mxu0 %v576
        %1400 = vmatmul.mubr.bf16.gmra.mrb[0].mxu0 %v575
        %v1401 = vpop.f32.mrb[0].mxu0
        %v1402 = vadd.f32 0.0, %v1401
        %v1403 = vpop.f32.mrb[0].mxu0
        %v1404 = vpop.f32.mrb[0].mxu0
        %v1405 = vadd.f32 0.0, %v1404
        %v1406 = vpop.f32.mrb[0].mxu0
        %1407 = vmatprep.mubr.bf16.mxu0 %v588
        %1408 = vmatmul.mubr.bf16.gmra.mrb[0].mxu0 %v587
        %v1409 = vpop.f32.mrb[0].mxu0
        %v1410 = vadd.f32 0.0, %v1409
        %v1411 = vpop.f32.mrb[0].mxu0
        %v1412 = vpop.f32.mrb[0].mxu0
        %v1413 = vadd.f32 0.0, %v1412
        %v1414 = vpop.f32.mrb[0].mxu0
        %1415 = vdwg.mxu0
        %1416 = vmatprep.subr.bf16.mxu0 0
        %1417 = vmatpush1.bf16.msra.mxu0 %v1191
        %1418 = vmatprep.subr.bf16.mxu0 0
        %1419 = vmatpush1.bf16.msra.mxu0 %v1192
        %1420 = vmatprep.subr.bf16.mxu0 0
        %1421 = vmatpush1.bf16.msra.mxu0 %v1193
        %1422 = vmatprep.subr.bf16.mxu0 0
        %1423 = vmatpush1.bf16.msra.mxu0 %v1194
        %1424 = vmatprep.subr.bf16.mxu0 0
        %1425 = vmatpush1.bf16.msra.mxu0 %v1195
        %1426 = vmatprep.subr.bf16.mxu0 0
        %1427 = vmatpush1.bf16.msra.mxu0 %v1196
        %1428 = vmatprep.subr.bf16.mxu0 0
        %1429 = vmatpush1.bf16.msra.mxu0 %v1197
        %1430 = vmatprep.subr.bf16.mxu0 0
        %1431 = vmatpush1.bf16.msra.mxu0 %v1198
        %1432 = vmatprep.subr.bf16.mxu0 0
        %1433 = vmatpush1.bf16.msra.mxu0 %v1199
        %1434 = vmatprep.subr.bf16.mxu0 0
        %1435 = vmatpush1.bf16.msra.mxu0 %v1200
        %1436 = vmatprep.subr.bf16.mxu0 0
        %1437 = vmatpush1.bf16.msra.mxu0 %v1201
        %1438 = vmatprep.subr.bf16.mxu0 0
        %1439 = vmatpush1.bf16.msra.mxu0 %v1202
        %1440 = vmatprep.subr.bf16.mxu0 0
        %1441 = vmatpush1.bf16.msra.mxu0 %v1203
        %1442 = vmatprep.subr.bf16.mxu0 0
        %1443 = vmatpush1.bf16.msra.mxu0 %v1204
        %1444 = vmatprep.subr.bf16.mxu0 0
        %1445 = vmatpush1.bf16.msra.mxu0 %v1205
        %1446 = vmatprep.subr.bf16.mxu0 0
        %1447 = vmatpush1.bf16.msra.mxu0 %v1206
        %1448 = vmatprep.mubr.bf16.mxu0 %v578
        %1449 = vmatmul.mubr.bf16.gmra.mrb[0].mxu0 %v577
        %v1450 = vpop.f32.mrb[0].mxu0
        %v1451 = vadd.f32 %v1402, %v1450
        %v1452 = vpop.f32.mrb[0].mxu0
        %v1453 = vpop.f32.mrb[0].mxu0
        %v1454 = vadd.f32 %v1405, %v1453
        %v1455 = vpop.f32.mrb[0].mxu0
        %1456 = vmatprep.mubr.bf16.mxu0 %v590
        %1457 = vmatmul.mubr.bf16.gmra.mrb[0].mxu0 %v589
        %v1458 = vpop.f32.mrb[0].mxu0
        %v1459 = vadd.f32 %v1410, %v1458
        %v1460 = vpop.f32.mrb[0].mxu0
        %v1461 = vpop.f32.mrb[0].mxu0
        %v1462 = vadd.f32 %v1413, %v1461
        %v1463 = vpop.f32.mrb[0].mxu0
        %1464 = vdwg.mxu0
        %1465 = vmatprep.subr.bf16.mxu0 0
        %1466 = vmatpush1.bf16.msra.mxu0 %v1207
        %1467 = vmatprep.subr.bf16.mxu0 0
        %1468 = vmatpush1.bf16.msra.mxu0 %v1208
        %1469 = vmatprep.subr.bf16.mxu0 0
        %1470 = vmatpush1.bf16.msra.mxu0 %v1209
        %1471 = vmatprep.subr.bf16.mxu0 0
        %1472 = vmatpush1.bf16.msra.mxu0 %v1210
        %1473 = vmatprep.subr.bf16.mxu0 0
        %1474 = vmatpush1.bf16.msra.mxu0 %v1211
        %1475 = vmatprep.subr.bf16.mxu0 0
        %1476 = vmatpush1.bf16.msra.mxu0 %v1212
        %1477 = vmatprep.subr.bf16.mxu0 0
        %1478 = vmatpush1.bf16.msra.mxu0 %v1213
        %1479 = vmatprep.subr.bf16.mxu0 0
        %1480 = vmatpush1.bf16.msra.mxu0 %v1214
        %1481 = vmatprep.subr.bf16.mxu0 0
        %1482 = vmatpush1.bf16.msra.mxu0 %v1215
        %1483 = vmatprep.subr.bf16.mxu0 0
        %1484 = vmatpush1.bf16.msra.mxu0 %v1216
        %1485 = vmatprep.subr.bf16.mxu0 0
        %1486 = vmatpush1.bf16.msra.mxu0 %v1217
        %1487 = vmatprep.subr.bf16.mxu0 0
        %1488 = vmatpush1.bf16.msra.mxu0 %v1218
        %1489 = vmatprep.subr.bf16.mxu0 0
        %1490 = vmatpush1.bf16.msra.mxu0 %v1219
        %1491 = vmatprep.subr.bf16.mxu0 0
        %1492 = vmatpush1.bf16.msra.mxu0 %v1220
        %1493 = vmatprep.subr.bf16.mxu0 0
        %1494 = vmatpush1.bf16.msra.mxu0 %v1221
        %1495 = vmatprep.subr.bf16.mxu0 0
        %1496 = vmatpush1.bf16.msra.mxu0 %v1222
        %1497 = vmatprep.mubr.bf16.mxu0 %v580
        %1498 = vmatmul.mubr.bf16.gmra.mrb[0].mxu0 %v579
        %v1499 = vpop.f32.mrb[0].mxu0
        %v1500 = vadd.f32 %v1451, %v1499
        %v1501 = vpop.f32.mrb[0].mxu0
        %v1502 = vpop.f32.mrb[0].mxu0
        %v1503 = vadd.f32 %v1454, %v1502
        %v1504 = vpop.f32.mrb[0].mxu0
        %1505 = vmatprep.mubr.bf16.mxu0 %v592
        %1506 = vmatmul.mubr.bf16.gmra.mrb[0].mxu0 %v591
        %v1507 = vpop.f32.mrb[0].mxu0
        %v1508 = vadd.f32 %v1459, %v1507
        %v1509 = vpop.f32.mrb[0].mxu0
        %v1510 = vpop.f32.mrb[0].mxu0
        %v1511 = vadd.f32 %v1462, %v1510
        %v1512 = vpop.f32.mrb[0].mxu0
        %1513 = vdwg.mxu0
        %1514 = vmatprep.subr.bf16.mxu0 0
        %1515 = vmatpush1.bf16.msra.mxu0 %v1223
        %1516 = vmatprep.subr.bf16.mxu0 0
        %1517 = vmatpush1.bf16.msra.mxu0 %v1224
        %1518 = vmatprep.subr.bf16.mxu0 0
        %1519 = vmatpush1.bf16.msra.mxu0 %v1225
        %1520 = vmatprep.subr.bf16.mxu0 0
        %1521 = vmatpush1.bf16.msra.mxu0 %v1226
        %1522 = vmatprep.subr.bf16.mxu0 0
        %1523 = vmatpush1.bf16.msra.mxu0 %v1227
        %1524 = vmatprep.subr.bf16.mxu0 0
        %1525 = vmatpush1.bf16.msra.mxu0 %v1228
        %1526 = vmatprep.subr.bf16.mxu0 0
        %1527 = vmatpush1.bf16.msra.mxu0 %v1229
        %1528 = vmatprep.subr.bf16.mxu0 0
        %1529 = vmatpush1.bf16.msra.mxu0 %v1230
        %1530 = vmatprep.subr.bf16.mxu0 0
        %1531 = vmatpush1.bf16.msra.mxu0 %v1231
        %1532 = vmatprep.subr.bf16.mxu0 0
        %1533 = vmatpush1.bf16.msra.mxu0 %v1232
        %1534 = vmatprep.subr.bf16.mxu0 0
        %1535 = vmatpush1.bf16.msra.mxu0 %v1233
        %1536 = vmatprep.subr.bf16.mxu0 0
        %1537 = vmatpush1.bf16.msra.mxu0 %v1234
        %1538 = vmatprep.subr.bf16.mxu0 0
        %1539 = vmatpush1.bf16.msra.mxu0 %v1235
        %1540 = vmatprep.subr.bf16.mxu0 0
        %1541 = vmatpush1.bf16.msra.mxu0 %v1236
        %1542 = vmatprep.subr.bf16.mxu0 0
        %1543 = vmatpush1.bf16.msra.mxu0 %v1237
        %1544 = vmatprep.subr.bf16.mxu0 0
        %1545 = vmatpush1.bf16.msra.mxu0 %v1238
        %1546 = vmatprep.mubr.bf16.mxu0 %v582
        %1547 = vmatmul.mubr.bf16.gmra.mrb[0].mxu0 %v581
        %v1548 = vpop.f32.mrb[0].mxu0
        %v1549 = vadd.f32 %v1500, %v1548
        %v1550 = vpop.f32.mrb[0].mxu0
        %v1551 = vpop.f32.mrb[0].mxu0
        %v1552 = vadd.f32 %v1503, %v1551
        %v1553 = vpop.f32.mrb[0].mxu0
        %1554 = vmatprep.mubr.bf16.mxu0 %v594
        %1555 = vmatmul.mubr.bf16.gmra.mrb[0].mxu0 %v593
        %v1556 = vpop.f32.mrb[0].mxu0
        %v1557 = vadd.f32 %v1508, %v1556
        %v1558 = vpop.f32.mrb[0].mxu0
        %v1559 = vpop.f32.mrb[0].mxu0
        %v1560 = vadd.f32 %v1511, %v1559
        %v1561 = vpop.f32.mrb[0].mxu0
        %1562 = vdwg.mxu0
        %1563 = vmatprep.subr.bf16.mxu0 0
        %1564 = vmatpush1.bf16.msra.mxu0 %v1239
        %1565 = vmatprep.subr.bf16.mxu0 0
        %1566 = vmatpush1.bf16.msra.mxu0 %v1240
        %1567 = vmatprep.subr.bf16.mxu0 0
        %1568 = vmatpush1.bf16.msra.mxu0 %v1241
        %1569 = vmatprep.subr.bf16.mxu0 0
        %1570 = vmatpush1.bf16.msra.mxu0 %v1242
        %1571 = vmatprep.subr.bf16.mxu0 0
        %1572 = vmatpush1.bf16.msra.mxu0 %v1243
        %1573 = vmatprep.subr.bf16.mxu0 0
        %1574 = vmatpush1.bf16.msra.mxu0 %v1244
        %1575 = vmatprep.subr.bf16.mxu0 0
        %1576 = vmatpush1.bf16.msra.mxu0 %v1245
        %1577 = vmatprep.subr.bf16.mxu0 0
        %1578 = vmatpush1.bf16.msra.mxu0 %v1246
        %1579 = vmatprep.subr.bf16.mxu0 0
        %1580 = vmatpush1.bf16.msra.mxu0 %v1247
        %1581 = vmatprep.subr.bf16.mxu0 0
        %1582 = vmatpush1.bf16.msra.mxu0 %v1248
        %1583 = vmatprep.subr.bf16.mxu0 0
        %1584 = vmatpush1.bf16.msra.mxu0 %v1249
        %1585 = vmatprep.subr.bf16.mxu0 0
        %1586 = vmatpush1.bf16.msra.mxu0 %v1250
        %1587 = vmatprep.subr.bf16.mxu0 0
        %1588 = vmatpush1.bf16.msra.mxu0 %v1251
        %1589 = vmatprep.subr.bf16.mxu0 0
        %1590 = vmatpush1.bf16.msra.mxu0 %v1252
        %1591 = vmatprep.subr.bf16.mxu0 0
        %1592 = vmatpush1.bf16.msra.mxu0 %v1253
        %1593 = vmatprep.subr.bf16.mxu0 0
        %1594 = vmatpush1.bf16.msra.mxu0 %v1254
        %1595 = vmatprep.mubr.bf16.mxu0 %v584
        %1596 = vmatmul.mubr.bf16.gmra.mrb[0].mxu0 %v583
        %v1597 = vpop.f32.mrb[0].mxu0
        %v1598 = vadd.f32 %v1549, %v1597
        %v1599 = vpop.f32.mrb[0].mxu0
        %v1600 = vpop.f32.mrb[0].mxu0
        %v1601 = vadd.f32 %v1552, %v1600
        %v1602 = vpop.f32.mrb[0].mxu0
        %1603 = vmatprep.mubr.bf16.mxu0 %v596
        %1604 = vmatmul.mubr.bf16.gmra.mrb[0].mxu0 %v595
        %v1605 = vpop.f32.mrb[0].mxu0
        %v1606 = vadd.f32 %v1557, %v1605
        %v1607 = vpop.f32.mrb[0].mxu0
        %v1608 = vpop.f32.mrb[0].mxu0
        %v1609 = vadd.f32 %v1560, %v1608
        %v1610 = vpop.f32.mrb[0].mxu0
        %1611 = vdwg.mxu0
        %1612 = vmatprep.subr.bf16.mxu0 0
        %1613 = vmatpush1.bf16.msra.mxu0 %v1255
        %1614 = vmatprep.subr.bf16.mxu0 0
        %1615 = vmatpush1.bf16.msra.mxu0 %v1256
        %1616 = vmatprep.subr.bf16.mxu0 0
        %1617 = vmatpush1.bf16.msra.mxu0 %v1257
        %1618 = vmatprep.subr.bf16.mxu0 0
        %1619 = vmatpush1.bf16.msra.mxu0 %v1258
        %1620 = vmatprep.subr.bf16.mxu0 0
        %1621 = vmatpush1.bf16.msra.mxu0 %v1259
        %1622 = vmatprep.subr.bf16.mxu0 0
        %1623 = vmatpush1.bf16.msra.mxu0 %v1260
        %1624 = vmatprep.subr.bf16.mxu0 0
        %1625 = vmatpush1.bf16.msra.mxu0 %v1261
        %1626 = vmatprep.subr.bf16.mxu0 0
        %1627 = vmatpush1.bf16.msra.mxu0 %v1262
        %1628 = vmatprep.subr.bf16.mxu0 0
        %1629 = vmatpush1.bf16.msra.mxu0 %v1263
        %1630 = vmatprep.subr.bf16.mxu0 0
        %1631 = vmatpush1.bf16.msra.mxu0 %v1264
        %1632 = vmatprep.subr.bf16.mxu0 0
        %1633 = vmatpush1.bf16.msra.mxu0 %v1265
        %1634 = vmatprep.subr.bf16.mxu0 0
        %1635 = vmatpush1.bf16.msra.mxu0 %v1266
        %1636 = vmatprep.subr.bf16.mxu0 0
        %1637 = vmatpush1.bf16.msra.mxu0 %v1267
        %1638 = vmatprep.subr.bf16.mxu0 0
        %1639 = vmatpush1.bf16.msra.mxu0 %v1268
        %1640 = vmatprep.subr.bf16.mxu0 0
        %1641 = vmatpush1.bf16.msra.mxu0 %v1269
        %1642 = vmatprep.subr.bf16.mxu0 0
        %1643 = vmatpush1.bf16.msra.mxu0 %v1270
        %1644 = vmatprep.mubr.bf16.mxu0 %v586
        %1645 = vmatmul.mubr.bf16.gmra.mrb[0].mxu0 %v585
        %v1646 = vpop.f32.mrb[0].mxu0
        %v1647 = vadd.f32 %v1598, %v1646
        %v1648 = vpop.f32.mrb[0].mxu0
        %v1649 = vpop.f32.mrb[0].mxu0
        %v1650 = vadd.f32 %v1601, %v1649
        %v1651 = vpop.f32.mrb[0].mxu0
        %1652 = vmatprep.mubr.bf16.mxu0 %v598
        %1653 = vmatmul.mubr.bf16.gmra.mrb[0].mxu0 %v597
        %v1654 = vpop.f32.mrb[0].mxu0
        %v1655 = vadd.f32 %v1606, %v1654
        %v1656 = vpop.f32.mrb[0].mxu0
        %v1657 = vpop.f32.mrb[0].mxu0
        %v1658 = vadd.f32 %v1609, %v1657
        %v1659 = vpop.f32.mrb[0].mxu0
        %1660 = vdwg.mxu0
        %v1661 = vadd.f32 %v571, %v1647
        %v1662 = vadd.f32 %v572, %v1650
        %v1663 = vadd.f32 %v573, %v1655
        %v1664 = vadd.f32 %v574, %v1658
        %1665 = vst [vmem:[#allocation2] sm:$0xff] %v1661
        %1666 = vst [vmem:[#allocation2 + $0x8] sm:$0xff] %v1662
        %1667 = vst [vmem:[#allocation2 + $0x10] sm:$0xff] %v1663
        %1668 = vst [vmem:[#allocation2 + $0x18] sm:$0xff] %v1664
        // Predicated region
        $region45: #{tpu_custom_call.1} parent=35 // pred_check
          %p1669 = pneg %p263
        $region46: #{tpu_custom_call.1} parent=35 // pred_check_branch
          %1671 = sbr.rel (%p1669) target = $region48
        $region47: #{tpu_custom_call.1} parent=35 // pred_region
          %v1672 = vld [vmem:[#allocation2] sm:$0xff]
          %v1673 = vld [vmem:[#allocation2 + $0x8] sm:$0xff]
          %v1674 = vld [vmem:[#allocation2 + $0x10] sm:$0xff]
          %v1675 = vld [vmem:[#allocation2 + $0x18] sm:$0xff]
          %v1676 = vld [vmem:[%s3] sm:$0x1]
          %v1677 = vlaneseq
          %v1678 = vshrl.u32 %v1677, 7
          %v1679 = vsub.s32 0, %v1678
          %v1680 = vrot.slane %v1676, %v1679
          %v1681 = vmul.f32 %v1672, %v1680
          %v1682 = vmul.f32 %v1673, %v1680
          %v1683 = vmul.f32 %v1674, %v1680
          %v1684 = vmul.f32 %v1675, %v1680
          %v1685 = vld [vmem:[%s3 + $0x1] sm:$0x1]
          %v1686 = vlaneseq
          %v1687 = vshrl.u32 %v1686, 7
          %v1688 = vsub.s32 0, %v1687
          %v1689 = vrot.slane %v1685, %v1688
          %v1690 = vadd.f32 %v1681, %v1689
          %v1691 = vadd.f32 %v1682, %v1689
          %v1692 = vadd.f32 %v1683, %v1689
          %v1693 = vadd.f32 %v1684, %v1689
          %1694 = vst [vmem:[%s244] sm:$0xff] %v1690
          %1695 = vst [vmem:[%s244 + $0x8] sm:$0xff] %v1691
          %1696 = vst [vmem:[%s244 + $0x10] sm:$0xff] %v1692
          %1697 = vst [vmem:[%s244 + $0x18] sm:$0xff] %v1693
        $region48: #{tpu_custom_call.1} parent=35 // pred_fallthru
          _
        %s1698 = sand.u32 %s135, 1
        %s1699 = scalar_lea.sflag [#allocation6], %s1698
        %s1700 = sand.u32 %s135, 1
        %s1701 = smul.addr %s1700, 32
        %s1702 = scalar_lea.vmem [#allocation7], %s1701
        // Predicated region
        $region49: #{tpu_custom_call.1} parent=35 // pred_check
          %p1703 = pneg %p145
        $region50: #{tpu_custom_call.1} parent=35 // pred_check_branch
          %1705 = sbr.rel (%p1703) target = $region52
        $region51: #{tpu_custom_call.1} parent=35 // pred_region
          %s1706 = smul.u32 4, %s23
          %s1708 = ssub.s32 512, 512
          %1709 = vsyncadd %s1699, %s1708
          %s1710 = smul.addr %s1706, 128
          %s1711 = scalar_lea.hbm %s4, %s1710
          %s1712 = sshll.u32 %s1702, 4
          %s1713 = int_to_ptr.vmem [resolvable:$true] %s1712
          %1718 = dma.vmem_to_hbm [thread:$0]  %s1713, 512, %s1711, %s1699, 128, 128, 8
        $region52: #{tpu_custom_call.1} parent=35 // pred_fallthru
          _
      $region36: #{tpu_custom_call.1} parent=5 // pred_fallthru
        _
      %p1719 = scmp.le.s32.totalorder 2, %s14
      // Predicated region
      $region53: #{tpu_custom_call.1} parent=5 // pred_check
        %p1720 = pneg %p1719
      $region54: #{tpu_custom_call.1} parent=5 // pred_check_branch
        %1722 = sbr.rel (%p1720) target = $region56
      $region55: #{tpu_custom_call.1} parent=5 // pred_region
        %s1723 = ssub.s32 %s14, 2
        // Predicated region
        $region57: #{tpu_custom_call.1} parent=55 // pred_check
          %p1724 = pneg %p151
        $region58: #{tpu_custom_call.1} parent=55 // pred_check_branch
          %1726 = sbr.rel (%p1724) target = $region60
        $region59: #{tpu_custom_call.1} parent=55 // pred_region
          %s1727 = sand.u32 %s136, 1
          %s1728 = scalar_lea.sflag [#allocation6], %s1727
          %s1729 = sand.u32 %s136, 1
          %s1730 = smul.addr %s1729, 32
          %s1731 = scalar_lea.vmem [#allocation7], %s1730
          %1732 = dma.done %s1728, 512
        $region60: #{tpu_custom_call.1} parent=55 // pred_fallthru
          _
      $region56: #{tpu_custom_call.1} parent=5 // pred_fallthru
        _
    $region6: #{tpu_custom_call.1} parent=1 // loop_footer
      %s18 = sadd.s32 1, %s14
    $region7: #{tpu_custom_call.1} parent=1 // loop_footer_branch
      %13 = sbr.rel target = $region3
    $region8: #{tpu_custom_call.1} parent=1 // loop_exit
      _
    %1733 = vsyncpa [#allocation5], 1
    %s1734 = scalar_lea.sflag [#allocation5], 1
    %1735 = vsyncpa %s1734, 1
    %1736 = vsyncpa [#allocation6], 1
    %s1737 = scalar_lea.sflag [#allocation6], 1
    %1738 = vsyncpa %s1737, 1

</llo_original>
